<compile_context>
chip_gen: v7x
topology: tpu7x:2x2x1
jax: 0.10.0
libtpu: 0.0.40
codegen_flags: <defaults>
</compile_context>

<pallas_src>
import functools

import jax
import jax.numpy as jnp
from jax import lax
from jax.experimental import pallas as pl
from jax.experimental.pallas import tpu as pltpu


def downsample_conv_kernel(w_ref, b_ref, ph_ref, o_ref, *, Ho, Wo):
    """Strided 3x3 conv for one image.

    The 9 taps of the stride-2 conv are unit-offset static slices of the
    space-to-depth phases; each feeds a (Ho*Wo, C) @ (C, C) MXU matmul with
    f32 accumulation.

    w_ref:  (9, Cin, Cout)      tap-major weights                 [resident]
    b_ref:  (1, C)              f32 bias                          [resident]
    ph_ref: (4*(Ho+1), Wo+1, C) space-to-depth phases, channels-last
    o_ref:  (Ho*Wo, C)          output block (channels on the lane axis)
    """
    C = o_ref.shape[-1]
    Hh = ph_ref.shape[0] // 4            # = Ho + 1 (phase row extent)
    acc = jnp.zeros((Ho * Wo, C), jnp.float32)
    for kh in range(3):
        for kw in range(3):
            phase = (kh % 2) * 2 + (kw % 2)
            r0 = phase * Hh + kh // 2
            c0 = kw // 2
            # Unit-offset static slice of a phase == the (kh, kw) stride-2 tap.
            tap = ph_ref[r0:r0 + Ho, c0:c0 + Wo, :]          # (Ho, Wo, C)
            # Collapse of the two leading dims is layout-free when Wo % 8 == 0.
            acc = acc + jnp.dot(tap.reshape(Ho * Wo, C),
                                w_ref[kh * 3 + kw],
                                preferred_element_type=jnp.float32)
    o_ref[...] = (acc + b_ref[...]).astype(o_ref.dtype)


def _vmem_limit_bytes(bytes_needed):
    """Size the scoped-VMEM request from the tile footprint, below physical."""
    try:
        physical = pltpu.get_tpu_info().vmem_capacity_bytes
    except Exception:
        physical = 64 << 20              # conservative: v7x per-TensorCore VMEM
    # 2x the tile footprint for Mosaic-internal scratch / relayout temporaries,
    # floor of 32 MiB, never more than 75% of physical VMEM.
    return int(min(max(2 * bytes_needed, 32 << 20), (physical * 3) // 4))


def down_sample(x, weight, bias, *, compute_dtype=jnp.bfloat16):
    """Pallas DownSample forward.

    x:      (B, C, H, W)  NCHW
    weight: (C, C, 3, 3)  torch Conv2d layout (O, I, kH, kW)
    bias:   (C,)
    returns (B, C, Ho, Wo) with Ho = (H+1)//2, Wo = (W+1)//2  (stride 2, pad 1)

    compute_dtype: MXU operand dtype (accumulation is always f32).  bf16 is the
    right choice on v5e/v6e/v7x; expect ~1e-2 relative error vs f32 because the
    contraction length is 9*C.  Pass jnp.float32 for bit-tight numerics.
    """
    B, C, H, W = x.shape
    Ho = (H - 1) // 2 + 1
    Wo = (W - 1) // 2 + 1
    Hh, Wh = Ho + 1, Wo + 1              # phase extents of the zero-padded input
    P = Ho * Wo

    # ---- single cheap layout pass (replaces the 9x HBM im2col) --------------
    # zero-pad to (2*Hh, 2*Wh), then 2x2 space-to-depth + channels-last:
    #   phases[b, (pr*2+pc)*Hh + i, j, c] = xpad[b, c, 2*i + pr, 2*j + pc]
    xpad = jnp.pad(x, ((0, 0), (0, 0), (1, 2 * Hh - H - 1), (1, 2 * Wh - W - 1)))
    phases = xpad.reshape(B, C, Hh, 2, Wh, 2).transpose(0, 3, 5, 2, 4, 1)
    phases = phases.reshape(B, 4 * Hh, Wh, C).astype(compute_dtype)

    # weight (O, I, kh, kw) -> (9, I, O) so each tap matmul is (P, I) @ (I, O).
    w_taps = jnp.transpose(weight, (2, 3, 1, 0)).reshape(9, C, C).astype(compute_dtype)
    b_row = bias.reshape(1, C).astype(jnp.float32)

    itemsize = jnp.dtype(compute_dtype).itemsize
    out_itemsize = jnp.dtype(x.dtype).itemsize
    tile_bytes = (2 * (4 * Hh * Wh * C) * itemsize     # double-buffered phase block
                  + 2 * (P * C) * out_itemsize         # double-buffered output block
                  + 2 * 9 * C * C * itemsize           # weight (default 2-buffered)
                  + 2 * C * 4)                         # bias
    cost = pl.CostEstimate(
        flops=2 * B * P * 9 * C * C,
        transcendentals=0,
        bytes_accessed=(phases.size * itemsize + w_taps.size * itemsize
                        + b_row.size * 4 + B * P * C * out_itemsize),
    )

    out_flat = pl.pallas_call(
        functools.partial(downsample_conv_kernel, Ho=Ho, Wo=Wo),
        out_shape=jax.ShapeDtypeStruct((B, P, C), x.dtype),
        grid=(B,),
        in_specs=[
            pl.BlockSpec((9, C, C), lambda b: (0, 0, 0)),          # resident weight
            pl.BlockSpec((1, C), lambda b: (0, 0)),                # resident bias
            pl.BlockSpec((None, 4 * Hh, Wh, C), lambda b: (b, 0, 0, 0)),
        ],
        out_specs=pl.BlockSpec((None, P, C), lambda b: (b, 0, 0)),
        compiler_params=pltpu.CompilerParams(
            dimension_semantics=("parallel",),
            vmem_limit_bytes=_vmem_limit_bytes(tile_bytes),
        ),
        cost_estimate=cost,
    )(w_taps, b_row, phases)

    # (B, Ho*Wo, C) -> (B, C, Ho, Wo).  In a full NHWC VQVAE this transpose
    # disappears; it exists only to match the NCHW module interface.
    return jnp.transpose(out_flat.reshape(B, Ho, Wo, C), (0, 3, 1, 2))


def down_sample_reference(x, weight, bias):
    """Pure-JAX reference mirroring nn.Conv2d(C, C, 3, stride=2, padding=1)."""
    out = lax.conv_general_dilated(
        x.astype(jnp.float32),
        weight.astype(jnp.float32),
        window_strides=(2, 2),
        padding=((1, 1), (1, 1)),
        dimension_numbers=("NCHW", "OIHW", "NCHW"),
        precision=lax.Precision.HIGHEST,
    )
    return out + bias.reshape(1, -1, 1, 1)


if __name__ == "__main__":
    B, C, H, W = 2, 32, 16, 16

    key = jax.random.PRNGKey(0)
    kx, kw, kb = jax.random.split(key, 3)
    x = jax.random.normal(kx, (B, C, H, W), dtype=jnp.float32)
    weight = 0.1 * jax.random.normal(kw, (C, C, 3, 3), dtype=jnp.float32)
    bias = 0.1 * jax.random.normal(kb, (C,), dtype=jnp.float32)

    ref = down_sample_reference(x, weight, bias)
    down = jax.jit(down_sample, static_argnames=("compute_dtype",))

    # 1) f32 operands: bit-tight check against the XLA conv reference.
    out_f32 = jax.block_until_ready(down(x, weight, bias, compute_dtype=jnp.float32))
    assert out_f32.shape == (B, C, (H + 1) // 2, (W + 1) // 2), out_f32.shape
    err_f32 = jnp.max(jnp.abs(out_f32 - ref))
    assert jnp.allclose(out_f32, ref, rtol=2e-3, atol=2e-3), f"f32 max err {err_f32}"

    # 2) bf16 operands (default; perf-review item for v5e/v6e/v7x).
    #    Tight check against a reference that uses the same bf16-rounded
    #    operands with f32 accumulation (exactly what the MXU computes) ...
    out_bf16 = jax.block_until_ready(down(x, weight, bias))
    ref_bf16 = down_sample_reference(
        x.astype(jnp.bfloat16).astype(jnp.float32),
        weight.astype(jnp.bfloat16).astype(jnp.float32),
        bias,
    )
    assert out_bf16.shape == out_f32.shape
    err_q = jnp.max(jnp.abs(out_bf16 - ref_bf16))
    assert jnp.allclose(out_bf16, ref_bf16, rtol=2e-3, atol=2e-3), f"bf16 max err {err_q}"
    #    ... and a loose sanity check against the true f32 reference
    #    (K = 9*C bf16 products land around 1e-2 relative).
    err_bf16 = jnp.max(jnp.abs(out_bf16 - ref))
    assert jnp.allclose(out_bf16, ref, rtol=2e-2, atol=4e-2), f"bf16 vs f32 err {err_bf16}"

    print("KERNEL_OK")
</pallas_src>

<mosaic_0001>
module attributes {stable_mosaic.version = 11 : i64} {
  func.func @downsample_conv_kernel(%arg0: i32, %arg1: memref<9x32x32xf32, #tpu.memory_space<vmem>>, %arg2: memref<1x32xf32, #tpu.memory_space<vmem>>, %arg3: memref<1x36x9x32xf32, #tpu.memory_space<vmem>>, %arg4: memref<1x64x32xf32, #tpu.memory_space<vmem>>) attributes {dimension_semantics = [#tpu.dimension_semantics<parallel>], iteration_bounds = array<i64: 2>, scalar_prefetch = 0 : i64, scratch_operands = 0 : i64, tpu.core_type = #tpu.core_type<tc>, window_params = [{pipeline_mode = #tpu.pipeline_mode<synchronous>, transform_indices = @transform_0, window_bounds = array<i64: 9, 32, 32>}, {pipeline_mode = #tpu.pipeline_mode<synchronous>, transform_indices = @transform_1, window_bounds = array<i64: 1, 32>}, {transform_indices = @transform_2, window_bounds = array<i64: 1, 36, 9, 32>}, {transform_indices = @transform_3, window_bounds = array<i64: 1, 64, 32>}]} {
    %cst = arith.constant 0.000000e+00 : f32
    %0 = vector.broadcast %cst : f32 to vector<64x32xf32>
    %c0 = arith.constant 0 : index
    %c0_0 = arith.constant 0 : index
    %c0_1 = arith.constant 0 : index
    %c0_2 = arith.constant 0 : index
    %1 = vector.load %arg3[%c0, %c0_0, %c0_1, %c0_2] : memref<1x36x9x32xf32, #tpu.memory_space<vmem>>, vector<1x8x8x32xf32>
    %2 = vector.shape_cast %1 : vector<1x8x8x32xf32> to vector<8x8x32xf32>
    %3 = vector.shape_cast %2 : vector<8x8x32xf32> to vector<64x32xf32>
    %c0_3 = arith.constant 0 : index
    %c0_4 = arith.constant 0 : index
    %c0_5 = arith.constant 0 : index
    %4 = vector.load %arg1[%c0_3, %c0_4, %c0_5] : memref<9x32x32xf32, #tpu.memory_space<vmem>>, vector<1x32x32xf32>
    %5 = vector.shape_cast %4 : vector<1x32x32xf32> to vector<32x32xf32>
    %cst_6 = arith.constant dense<0.000000e+00> : vector<64x32xf32>
    %6 = tpu.matmul %3, %5, %cst_6 {dimension_numbers = #tpu.dot_dimension_numbers<[1], [0], [0], [1], [0, 0, 1, 1], [], []>} : vector<64x32xf32>, vector<32x32xf32>, vector<64x32xf32> -> vector<64x32xf32>
    %7 = arith.addf %0, %6 : vector<64x32xf32>
    %c0_7 = arith.constant 0 : index
    %c9 = arith.constant 9 : index
    %c0_8 = arith.constant 0 : index
    %c0_9 = arith.constant 0 : index
    %8 = vector.load %arg3[%c0_7, %c9, %c0_8, %c0_9] : memref<1x36x9x32xf32, #tpu.memory_space<vmem>>, vector<1x8x8x32xf32>
    %9 = vector.shape_cast %8 : vector<1x8x8x32xf32> to vector<8x8x32xf32>
    %10 = vector.shape_cast %9 : vector<8x8x32xf32> to vector<64x32xf32>
    %c1 = arith.constant 1 : index
    %c0_10 = arith.constant 0 : index
    %c0_11 = arith.constant 0 : index
    %11 = vector.load %arg1[%c1, %c0_10, %c0_11] : memref<9x32x32xf32, #tpu.memory_space<vmem>>, vector<1x32x32xf32>
    %12 = vector.shape_cast %11 : vector<1x32x32xf32> to vector<32x32xf32>
    %cst_12 = arith.constant dense<0.000000e+00> : vector<64x32xf32>
    %13 = tpu.matmul %10, %12, %cst_12 {dimension_numbers = #tpu.dot_dimension_numbers<[1], [0], [0], [1], [0, 0, 1, 1], [], []>} : vector<64x32xf32>, vector<32x32xf32>, vector<64x32xf32> -> vector<64x32xf32>
    %14 = arith.addf %7, %13 : vector<64x32xf32>
    %c0_13 = arith.constant 0 : index
    %c0_14 = arith.constant 0 : index
    %c1_15 = arith.constant 1 : index
    %c0_16 = arith.constant 0 : index
    %15 = vector.load %arg3[%c0_13, %c0_14, %c1_15, %c0_16] : memref<1x36x9x32xf32, #tpu.memory_space<vmem>>, vector<1x8x8x32xf32>
    %16 = vector.shape_cast %15 : vector<1x8x8x32xf32> to vector<8x8x32xf32>
    %17 = vector.shape_cast %16 : vector<8x8x32xf32> to vector<64x32xf32>
    %c2 = arith.constant 2 : index
    %c0_17 = arith.constant 0 : index
    %c0_18 = arith.constant 0 : index
    %18 = vector.load %arg1[%c2, %c0_17, %c0_18] : memref<9x32x32xf32, #tpu.memory_space<vmem>>, vector<1x32x32xf32>
    %19 = vector.shape_cast %18 : vector<1x32x32xf32> to vector<32x32xf32>
    %cst_19 = arith.constant dense<0.000000e+00> : vector<64x32xf32>
    %20 = tpu.matmul %17, %19, %cst_19 {dimension_numbers = #tpu.dot_dimension_numbers<[1], [0], [0], [1], [0, 0, 1, 1], [], []>} : vector<64x32xf32>, vector<32x32xf32>, vector<64x32xf32> -> vector<64x32xf32>
    %21 = arith.addf %14, %20 : vector<64x32xf32>
    %c0_20 = arith.constant 0 : index
    %c18 = arith.constant 18 : index
    %c0_21 = arith.constant 0 : index
    %c0_22 = arith.constant 0 : index
    %22 = vector.load %arg3[%c0_20, %c18, %c0_21, %c0_22] : memref<1x36x9x32xf32, #tpu.memory_space<vmem>>, vector<1x8x8x32xf32>
    %23 = vector.shape_cast %22 : vector<1x8x8x32xf32> to vector<8x8x32xf32>
    %24 = vector.shape_cast %23 : vector<8x8x32xf32> to vector<64x32xf32>
    %c3 = arith.constant 3 : index
    %c0_23 = arith.constant 0 : index
    %c0_24 = arith.constant 0 : index
    %25 = vector.load %arg1[%c3, %c0_23, %c0_24] : memref<9x32x32xf32, #tpu.memory_space<vmem>>, vector<1x32x32xf32>
    %26 = vector.shape_cast %25 : vector<1x32x32xf32> to vector<32x32xf32>
    %cst_25 = arith.constant dense<0.000000e+00> : vector<64x32xf32>
    %27 = tpu.matmul %24, %26, %cst_25 {dimension_numbers = #tpu.dot_dimension_numbers<[1], [0], [0], [1], [0, 0, 1, 1], [], []>} : vector<64x32xf32>, vector<32x32xf32>, vector<64x32xf32> -> vector<64x32xf32>
    %28 = arith.addf %21, %27 : vector<64x32xf32>
    %c0_26 = arith.constant 0 : index
    %c27 = arith.constant 27 : index
    %c0_27 = arith.constant 0 : index
    %c0_28 = arith.constant 0 : index
    %29 = vector.load %arg3[%c0_26, %c27, %c0_27, %c0_28] : memref<1x36x9x32xf32, #tpu.memory_space<vmem>>, vector<1x8x8x32xf32>
    %30 = vector.shape_cast %29 : vector<1x8x8x32xf32> to vector<8x8x32xf32>
    %31 = vector.shape_cast %30 : vector<8x8x32xf32> to vector<64x32xf32>
    %c4 = arith.constant 4 : index
    %c0_29 = arith.constant 0 : index
    %c0_30 = arith.constant 0 : index
    %32 = vector.load %arg1[%c4, %c0_29, %c0_30] : memref<9x32x32xf32, #tpu.memory_space<vmem>>, vector<1x32x32xf32>
    %33 = vector.shape_cast %32 : vector<1x32x32xf32> to vector<32x32xf32>
    %cst_31 = arith.constant dense<0.000000e+00> : vector<64x32xf32>
    %34 = tpu.matmul %31, %33, %cst_31 {dimension_numbers = #tpu.dot_dimension_numbers<[1], [0], [0], [1], [0, 0, 1, 1], [], []>} : vector<64x32xf32>, vector<32x32xf32>, vector<64x32xf32> -> vector<64x32xf32>
    %35 = arith.addf %28, %34 : vector<64x32xf32>
    %c0_32 = arith.constant 0 : index
    %c18_33 = arith.constant 18 : index
    %c1_34 = arith.constant 1 : index
    %c0_35 = arith.constant 0 : index
    %36 = vector.load %arg3[%c0_32, %c18_33, %c1_34, %c0_35] : memref<1x36x9x32xf32, #tpu.memory_space<vmem>>, vector<1x8x8x32xf32>
    %37 = vector.shape_cast %36 : vector<1x8x8x32xf32> to vector<8x8x32xf32>
    %38 = vector.shape_cast %37 : vector<8x8x32xf32> to vector<64x32xf32>
    %c5 = arith.constant 5 : index
    %c0_36 = arith.constant 0 : index
    %c0_37 = arith.constant 0 : index
    %39 = vector.load %arg1[%c5, %c0_36, %c0_37] : memref<9x32x32xf32, #tpu.memory_space<vmem>>, vector<1x32x32xf32>
    %40 = vector.shape_cast %39 : vector<1x32x32xf32> to vector<32x32xf32>
    %cst_38 = arith.constant dense<0.000000e+00> : vector<64x32xf32>
    %41 = tpu.matmul %38, %40, %cst_38 {dimension_numbers = #tpu.dot_dimension_numbers<[1], [0], [0], [1], [0, 0, 1, 1], [], []>} : vector<64x32xf32>, vector<32x32xf32>, vector<64x32xf32> -> vector<64x32xf32>
    %42 = arith.addf %35, %41 : vector<64x32xf32>
    %c0_39 = arith.constant 0 : index
    %c1_40 = arith.constant 1 : index
    %c0_41 = arith.constant 0 : index
    %c0_42 = arith.constant 0 : index
    %43 = vector.load %arg3[%c0_39, %c1_40, %c0_41, %c0_42] : memref<1x36x9x32xf32, #tpu.memory_space<vmem>>, vector<1x8x8x32xf32>
    %44 = vector.shape_cast %43 : vector<1x8x8x32xf32> to vector<8x8x32xf32>
    %45 = vector.shape_cast %44 : vector<8x8x32xf32> to vector<64x32xf32>
    %c6 = arith.constant 6 : index
    %c0_43 = arith.constant 0 : index
    %c0_44 = arith.constant 0 : index
    %46 = vector.load %arg1[%c6, %c0_43, %c0_44] : memref<9x32x32xf32, #tpu.memory_space<vmem>>, vector<1x32x32xf32>
    %47 = vector.shape_cast %46 : vector<1x32x32xf32> to vector<32x32xf32>
    %cst_45 = arith.constant dense<0.000000e+00> : vector<64x32xf32>
    %48 = tpu.matmul %45, %47, %cst_45 {dimension_numbers = #tpu.dot_dimension_numbers<[1], [0], [0], [1], [0, 0, 1, 1], [], []>} : vector<64x32xf32>, vector<32x32xf32>, vector<64x32xf32> -> vector<64x32xf32>
    %49 = arith.addf %42, %48 : vector<64x32xf32>
    %c0_46 = arith.constant 0 : index
    %c10 = arith.constant 10 : index
    %c0_47 = arith.constant 0 : index
    %c0_48 = arith.constant 0 : index
    %50 = vector.load %arg3[%c0_46, %c10, %c0_47, %c0_48] : memref<1x36x9x32xf32, #tpu.memory_space<vmem>>, vector<1x8x8x32xf32>
    %51 = vector.shape_cast %50 : vector<1x8x8x32xf32> to vector<8x8x32xf32>
    %52 = vector.shape_cast %51 : vector<8x8x32xf32> to vector<64x32xf32>
    %c7 = arith.constant 7 : index
    %c0_49 = arith.constant 0 : index
    %c0_50 = arith.constant 0 : index
    %53 = vector.load %arg1[%c7, %c0_49, %c0_50] : memref<9x32x32xf32, #tpu.memory_space<vmem>>, vector<1x32x32xf32>
    %54 = vector.shape_cast %53 : vector<1x32x32xf32> to vector<32x32xf32>
    %cst_51 = arith.constant dense<0.000000e+00> : vector<64x32xf32>
    %55 = tpu.matmul %52, %54, %cst_51 {dimension_numbers = #tpu.dot_dimension_numbers<[1], [0], [0], [1], [0, 0, 1, 1], [], []>} : vector<64x32xf32>, vector<32x32xf32>, vector<64x32xf32> -> vector<64x32xf32>
    %56 = arith.addf %49, %55 : vector<64x32xf32>
    %c0_52 = arith.constant 0 : index
    %c1_53 = arith.constant 1 : index
    %c1_54 = arith.constant 1 : index
    %c0_55 = arith.constant 0 : index
    %57 = vector.load %arg3[%c0_52, %c1_53, %c1_54, %c0_55] : memref<1x36x9x32xf32, #tpu.memory_space<vmem>>, vector<1x8x8x32xf32>
    %58 = vector.shape_cast %57 : vector<1x8x8x32xf32> to vector<8x8x32xf32>
    %59 = vector.shape_cast %58 : vector<8x8x32xf32> to vector<64x32xf32>
    %c8 = arith.constant 8 : index
    %c0_56 = arith.constant 0 : index
    %c0_57 = arith.constant 0 : index
    %60 = vector.load %arg1[%c8, %c0_56, %c0_57] : memref<9x32x32xf32, #tpu.memory_space<vmem>>, vector<1x32x32xf32>
    %61 = vector.shape_cast %60 : vector<1x32x32xf32> to vector<32x32xf32>
    %cst_58 = arith.constant dense<0.000000e+00> : vector<64x32xf32>
    %62 = tpu.matmul %59, %61, %cst_58 {dimension_numbers = #tpu.dot_dimension_numbers<[1], [0], [0], [1], [0, 0, 1, 1], [], []>} : vector<64x32xf32>, vector<32x32xf32>, vector<64x32xf32> -> vector<64x32xf32>
    %63 = arith.addf %56, %62 : vector<64x32xf32>
    %c0_59 = arith.constant 0 : index
    %c0_60 = arith.constant 0 : index
    %64 = vector.load %arg2[%c0_59, %c0_60] : memref<1x32xf32, #tpu.memory_space<vmem>>, vector<1x32xf32>
    %65 = vector.broadcast %64 : vector<1x32xf32> to vector<64x32xf32>
    %66 = arith.addf %63, %65 : vector<64x32xf32>
    %c0_61 = arith.constant 0 : index
    %c0_62 = arith.constant 0 : index
    %c0_63 = arith.constant 0 : index
    %67 = vector.load %arg4[%c0_61, %c0_62, %c0_63] : memref<1x64x32xf32, #tpu.memory_space<vmem>>, vector<1x64x32xf32>
    %68 = vector.shape_cast %67 : vector<1x64x32xf32> to vector<64x32xf32>
    %69 = vector.shape_cast %66 : vector<64x32xf32> to vector<1x64x32xf32>
    tpu.vector_store %arg4[%c0_61, %c0_62, %c0_63], %69 {strides = array<i32>} : memref<1x64x32xf32, #tpu.memory_space<vmem>>, vector<1x64x32xf32>,
    return
  }
  func.func @transform_0(%arg0: i32) -> (i32, i32, i32) {
    %c0_i32 = arith.constant 0 : i32
    %c0_i32_0 = arith.constant 0 : i32
    %c0_i32_1 = arith.constant 0 : i32
    %c0_i32_2 = arith.constant 0 : i32
    return %c0_i32, %c0_i32_0, %c0_i32_1 : i32, i32, i32
  }
  func.func @transform_1(%arg0: i32) -> (i32, i32) {
    %c0_i32 = arith.constant 0 : i32
    %c0_i32_0 = arith.constant 0 : i32
    %c0_i32_1 = arith.constant 0 : i32
    return %c0_i32, %c0_i32_0 : i32, i32
  }
  func.func @transform_2(%arg0: i32) -> (i32, i32, i32, i32) {
    %c0_i32 = arith.constant 0 : i32
    %c0_i32_0 = arith.constant 0 : i32
    %c0_i32_1 = arith.constant 0 : i32
    %c0_i32_2 = arith.constant 0 : i32
    return %arg0, %c0_i32, %c0_i32_0, %c0_i32_1 : i32, i32, i32, i32
  }
  func.func @transform_3(%arg0: i32) -> (i32, i32, i32) {
    %c0_i32 = arith.constant 0 : i32
    %c0_i32_0 = arith.constant 0 : i32
    %c0_i32_1 = arith.constant 0 : i32
    return %arg0, %c0_i32, %c0_i32_0 : i32, i32, i32
  }
}

</mosaic_0001>

<llo_original>
// kernel: down_sample.1
$region0: #{down_sample.1}
  #allocation0 [shape = 'u32[]', space=smem, size = 0x4, offset = 0x4, fixed_abs, tag = 'smem constant byte address 0x4 - core index']
  #allocation1 [shape = 'u32[144,128]{1,0:T(1,128)}', space=vmem, size = 0x12000, scoped, tag = 'internal scratch']
  %s0 = inlined_call_operand.vmem [shape: f32[9,32,32], index: 0, kind: input, shape index: {}]
  %s1 = inlined_call_operand.vmem [shape: f32[1,32], index: 1, kind: input, shape index: {}]
  %s2 = inlined_call_operand.vmem [shape: f32[2,36,9,32], index: 2, kind: input, shape index: {}]
  %s3 = inlined_call_operand.hbm [shape: f32[2,64,32], index: 3, kind: output, shape index: {}]
  %s4 = sld [smem:[#allocation0]]
  $region45: #{down_sample.1} parent=0
    _
  %s6 = ssub.s32 1, %s4
  %s7 = scalar_select 0, %s6, %s4
  $region1: #{down_sample.1} parent=0
    #allocation2 [shape = 'u8[65536]{0}', space=vmem, size = 0x10000, scoped, tag = 'output window, operand 0']
    #allocation3 [shape = 's32[2]{0}', space=sflag, size = 0x8, scoped, tag = 'scoped memory for down_sample.1']
    %8 = vsyncpa [#allocation3], 0
    %s9 = scalar_lea.sflag [#allocation3], 1
    %10 = vsyncpa %s9, 0
    loop: start=0, step=1, limit=4
    $region2: #{down_sample.1} parent=1 // loop_pre_header
      _
    $region3: #{down_sample.1} parent=1 // loop_header
      %s12 = sphi 0, %s16
      %p13 = scmp.ge.s32.totalorder %s12, 4
      %s20 = sphi 0, %s20
      %s22 = sphi 0, %s20
      %s23 = sphi 0, %s22
      %s37 = sphi 0, %s23
      %s41 = sphi 0, %s41
      %s43 = sphi 0, %s41
      %s44 = sphi 0, %s43
      %s58 = sphi 0, %s44
      %s64 = sphi 0, %s66
      %s67 = sphi 0, %s64
      %s68 = sphi 0, %s67
      %s84 = sphi 0, %s68
      %s90 = sphi 0, %s92
      %s93 = sphi 0, %s90
      %s94 = sphi 0, %s93
      %s110 = sphi 0, %s94
    $region4: #{down_sample.1} parent=1 // loop_header_branch
      %15 = sbr.rel (%p13) target = $region8
    $region5: #{down_sample.1} parent=1 // loop_body
      %s17 = ssub.s32 %s12, 1
      %s18 = ssub.s32 %s12, 2
      %s19 = sadd.s32 %s12, 1
      %s21 = sadd.s32 %s20, 1
      %p24 = scmp.eq.s32.totalorder %s12, 1
      %p25 = scmp.ne.s32.totalorder %s20, %s22
      %p26 = scmp.eq.s32.totalorder %s12, 0
      %p27 = por %p25, %p26
      %p28 = scmp.ne.s32.totalorder %s20, %s22
      %p29 = scmp.eq.s32.totalorder %s17, 1
      %p30 = por %p28, %p29
      %p31 = scmp.ne.s32.totalorder %s22, %s23
      %p32 = scmp.eq.s32.totalorder %s17, 0
      %p33 = por %p31, %p32
      %p34 = scmp.ne.s32.totalorder %s22, %s23
      %p35 = scmp.eq.s32.totalorder %s18, 1
      %p36 = por %p34, %p35
      %p38 = scmp.ne.s32.totalorder %s23, %s37
      %p39 = scmp.eq.s32.totalorder %s18, 0
      %p40 = por %p38, %p39
      %s42 = sadd.s32 %s41, 1
      %p45 = scmp.eq.s32.totalorder %s12, 1
      %p46 = scmp.ne.s32.totalorder %s41, %s43
      %p47 = scmp.eq.s32.totalorder %s12, 0
      %p48 = por %p46, %p47
      %p49 = scmp.ne.s32.totalorder %s41, %s43
      %p50 = scmp.eq.s32.totalorder %s17, 1
      %p51 = por %p49, %p50
      %p52 = scmp.ne.s32.totalorder %s43, %s44
      %p53 = scmp.eq.s32.totalorder %s17, 0
      %p54 = por %p52, %p53
      %p55 = scmp.ne.s32.totalorder %s43, %s44
      %p56 = scmp.eq.s32.totalorder %s18, 1
      %p57 = por %p55, %p56
      %p59 = scmp.ne.s32.totalorder %s44, %s58
      %p60 = scmp.eq.s32.totalorder %s18, 0
      %p61 = por %p59, %p60
      %s62 = ssub.s32 %s12, %s19
      %p63 = scmp.eq.s32.totalorder %s62, 0
      %s65 = sadd.s32 %s64, 1
      %s66 = scalar_select %p63, %s64, %s65
      %p69 = pneg %p63
      %p70 = scmp.eq.s32.totalorder %s12, 1
      %p71 = por %p69, %p70
      %p72 = scmp.ne.s32.totalorder %s64, %s67
      %p73 = scmp.eq.s32.totalorder %s12, 0
      %p74 = por %p72, %p73
      %p75 = scmp.ne.s32.totalorder %s64, %s67
      %p76 = scmp.eq.s32.totalorder %s17, 1
      %p77 = por %p75, %p76
      %p78 = scmp.ne.s32.totalorder %s67, %s68
      %p79 = scmp.eq.s32.totalorder %s17, 0
      %p80 = por %p78, %p79
      %p81 = scmp.ne.s32.totalorder %s67, %s68
      %p82 = scmp.eq.s32.totalorder %s18, 1
      %p83 = por %p81, %p82
      %p85 = scmp.ne.s32.totalorder %s68, %s84
      %p86 = scmp.eq.s32.totalorder %s18, 0
      %p87 = por %p85, %p86
      %s88 = ssub.s32 %s12, %s19
      %p89 = scmp.eq.s32.totalorder %s88, 0
      %s91 = sadd.s32 %s90, 1
      %s92 = scalar_select %p89, %s90, %s91
      %p95 = pneg %p89
      %p96 = scmp.eq.s32.totalorder %s12, 1
      %p97 = por %p95, %p96
      %p98 = scmp.ne.s32.totalorder %s90, %s93
      %p99 = scmp.eq.s32.totalorder %s12, 0
      %p100 = por %p98, %p99
      %p101 = scmp.ne.s32.totalorder %s90, %s93
      %p102 = scmp.eq.s32.totalorder %s17, 1
      %p103 = por %p101, %p102
      %p104 = scmp.ne.s32.totalorder %s93, %s94
      %p105 = scmp.eq.s32.totalorder %s17, 0
      %p106 = por %p104, %p105
      %p107 = scmp.ne.s32.totalorder %s93, %s94
      %p108 = scmp.eq.s32.totalorder %s18, 1
      %p109 = por %p107, %p108
      %p111 = scmp.ne.s32.totalorder %s94, %s110
      %p112 = scmp.eq.s32.totalorder %s18, 0
      %p113 = por %p111, %p112
      %p114 = scmp.le.s32.totalorder 1, %s12
      %p115 = scmp.lt.s32.totalorder %s12, 3
      %p116 = pnand %p114, %p115
      %p117 = pneg %p116
      // Predicated region
      $region9: #{down_sample.1} parent=5 // pred_check
        _
      $region10: #{down_sample.1} parent=5 // pred_check_branch
        %119 = sbr.rel (%p116) target = $region12
      $region11: #{down_sample.1} parent=5 // pred_region
        %s120 = ssub.s32 %s12, 1
        // Predicated region
        $region13: #{down_sample.1} parent=11 // pred_check
          %p121 = pneg %p33
        $region14: #{down_sample.1} parent=11 // pred_check_branch
          %123 = sbr.rel (%p121) target = $region16
        $region15: #{down_sample.1} parent=11 // pred_region
          _
        $region16: #{down_sample.1} parent=11 // pred_fallthru
          _
        // Predicated region
        $region17: #{down_sample.1} parent=11 // pred_check
          %p124 = pneg %p54
        $region18: #{down_sample.1} parent=11 // pred_check_branch
          %126 = sbr.rel (%p124) target = $region20
        $region19: #{down_sample.1} parent=11 // pred_region
          _
        $region20: #{down_sample.1} parent=11 // pred_fallthru
          _
      $region12: #{down_sample.1} parent=5 // pred_fallthru
        _
      %p127 = scmp.lt.s32.totalorder %s12, 2
      // Predicated region
      $region21: #{down_sample.1} parent=5 // pred_check
        %p128 = pneg %p127
      $region22: #{down_sample.1} parent=5 // pred_check_branch
        %130 = sbr.rel (%p128) target = $region24
      $region23: #{down_sample.1} parent=5 // pred_region
        // Predicated region
        $region25: #{down_sample.1} parent=23 // pred_check
          %p131 = pneg %p74
        $region26: #{down_sample.1} parent=23 // pred_check_branch
          %133 = sbr.rel (%p131) target = $region28
        $region27: #{down_sample.1} parent=23 // pred_region
          %p134 = scmp.lt.s32.totalorder %s12, 1
          %s135 = scalar_select %p134, %s12, 1
          %s136 = smul.addr %s135, 72
          %s137 = smul.addr %s136, 8
          %s138 = scalar_lea.vmem %s2, %s137
        $region28: #{down_sample.1} parent=23 // pred_fallthru
          _
      $region24: #{down_sample.1} parent=5 // pred_fallthru
        _
      %p139 = scmp.le.s32.totalorder 1, %s12
      %p140 = scmp.lt.s32.totalorder %s12, 3
      %p141 = pnand %p139, %p140
      %p142 = pneg %p141
      // Predicated region
      $region29: #{down_sample.1} parent=5 // pred_check
        _
      $region30: #{down_sample.1} parent=5 // pred_check_branch
        %144 = sbr.rel (%p141) target = $region32
      $region31: #{down_sample.1} parent=5 // pred_region
        %s145 = ssub.s32 %s12, 1
        %p146 = pneg %p33
        %p147 = pneg %p30
        %p148 = pneg %p54
        %p149 = pneg %p51
        %p150 = scmp.lt.s32.totalorder %s17, 1
        %s151 = scalar_select %p150, %s17, 1
        %s152 = smul.addr %s151, 72
        %s153 = smul.addr %s152, 8
        %s154 = scalar_lea.vmem %s2, %s153
        %p155 = pneg %p80
        %p156 = pneg %p77
        %p157 = pneg %p106
        %p158 = pneg %p103
        %s159 = sand.u32 %s93, 1
        %s160 = scalar_lea.sflag [#allocation3], %s159
        %s161 = sand.u32 %s93, 1
        %s162 = smul.addr %s161, 64
        %s163 = scalar_lea.vmem [#allocation2], %s162
        %p164 = scmp.lt.s32.totalorder %s17, 1
        %s165 = scalar_select %p164, %s17, 1
        %s166 = smul.addr %s165, 72
        %s167 = smul.addr %s166, 8
        %s168 = scalar_lea.vmem %s2, %s167
        %v169 = vld [vmem:[%s168] sm:$0xff]
        %v170 = vld [vmem:[%s168 + $0x10] sm:$0xff]
        %v171 = vld [vmem:[%s168 + $0x20] sm:$0xff]
        %v172 = vld [vmem:[%s168 + $0x30] sm:$0xff]
        %v173 = vld [vmem:[%s168 + $0x40] sm:$0xff]
        %v174 = vld [vmem:[%s168 + $0x50] sm:$0xff]
        %v175 = vld [vmem:[%s168 + $0x60] sm:$0xff]
        %v176 = vld [vmem:[%s168 + $0x70] sm:$0xff]
        %v177 = vld [vmem:[%s0] sm:$0xff]
        %v178 = vld [vmem:[%s0 + $0x8] sm:$0xff]
        %v179 = vld [vmem:[%s0 + $0x10] sm:$0xff]
        %v180 = vld [vmem:[%s0 + $0x18] sm:$0xff]
        %s181 = scalar_lea.vmem %s168, 144
        %v182 = vld [vmem:[%s181] sm:$0xff]
        %v183 = vld [vmem:[%s181 + $0x10] sm:$0xff]
        %v184 = vld [vmem:[%s181 + $0x20] sm:$0xff]
        %v185 = vld [vmem:[%s181 + $0x30] sm:$0xff]
        %v186 = vld [vmem:[%s181 + $0x40] sm:$0xff]
        %v187 = vld [vmem:[%s181 + $0x50] sm:$0xff]
        %v188 = vld [vmem:[%s181 + $0x60] sm:$0xff]
        %v189 = vld [vmem:[%s181 + $0x70] sm:$0xff]
        %s190 = scalar_lea.vmem %s0, 32
        %v191 = vld [vmem:[%s190] sm:$0xff]
        %v192 = vld [vmem:[%s190 + $0x8] sm:$0xff]
        %v193 = vld [vmem:[%s190 + $0x10] sm:$0xff]
        %v194 = vld [vmem:[%s190 + $0x18] sm:$0xff]
        %vm195 = vcmask 261120
        %v197 = vsel %vm195, %v182, 0
        %v200 = vsel %vm195, %v183, 0
        %v203 = vsel %vm195, %v184, 0
        %v206 = vsel %vm195, %v185, 0
        %v209 = vsel %vm195, %v186, 0
        %v212 = vsel %vm195, %v187, 0
        %v215 = vsel %vm195, %v188, 0
        %v218 = vsel %vm195, %v189, 0
        %220 = vmatprep.subr.mxu0 0.0
        %221 = vmatpush1.msra.mxu0 %v191
        %222 = vmatprep.subr.mxu0 0.0
        %223 = vmatpush1.msra.mxu0 %v192
        %224 = vmatprep.subr.mxu0 0.0
        %225 = vmatpush1.msra.mxu0 %v193
        %226 = vmatprep.subr.mxu0 0.0
        %227 = vmatpush1.msra.mxu0 %v194
        %228 = vmatprep.subr.mxu0 0.0
        %229 = vmatpush1.msra.mxu0 0.0
        %230 = vmatprep.subr.mxu0 0.0
        %231 = vmatpush1.msra.mxu0 0.0
        %232 = vmatprep.subr.mxu0 0.0
        %233 = vmatpush1.msra.mxu0 0.0
        %234 = vmatprep.subr.mxu0 0.0
        %235 = vmatpush1.msra.mxu0 0.0
        %236 = vmatprep.subr.mxu0 0.0
        %237 = vmatpush1.msra.mxu0 0.0
        %238 = vmatprep.subr.mxu0 0.0
        %239 = vmatpush1.msra.mxu0 0.0
        %240 = vmatprep.subr.mxu0 0.0
        %241 = vmatpush1.msra.mxu0 0.0
        %242 = vmatprep.subr.mxu0 0.0
        %243 = vmatpush1.msra.mxu0 0.0
        %244 = vmatprep.subr.mxu0 0.0
        %245 = vmatpush1.msra.mxu0 0.0
        %246 = vmatprep.subr.mxu0 0.0
        %247 = vmatpush1.msra.mxu0 0.0
        %248 = vmatprep.subr.mxu0 0.0
        %249 = vmatpush1.msra.mxu0 0.0
        %250 = vmatprep.subr.mxu0 0.0
        %251 = vmatpush1.msra.mxu0 0.0
        %252 = vmatprep.subr.mxu0 0.0
        %253 = vmatpush1.msra.mxu0 0.0
        %254 = vmatprep.subr.mxu0 0.0
        %255 = vmatpush1.msra.mxu0 0.0
        %256 = vmatprep.subr.mxu0 0.0
        %257 = vmatpush1.msra.mxu0 0.0
        %258 = vmatprep.subr.mxu0 0.0
        %259 = vmatpush1.msra.mxu0 0.0
        %260 = vmatprep.subr.mxu0 0.0
        %261 = vmatpush1.msra.mxu0 0.0
        %262 = vmatprep.subr.mxu0 0.0
        %263 = vmatpush1.msra.mxu0 0.0
        %264 = vmatprep.subr.mxu0 0.0
        %265 = vmatpush1.msra.mxu0 0.0
        %266 = vmatprep.subr.mxu0 0.0
        %267 = vmatpush1.msra.mxu0 0.0
        %268 = vmatprep.subr.mxu0 0.0
        %269 = vmatpush1.msra.mxu0 0.0
        %270 = vmatprep.subr.mxu0 0.0
        %271 = vmatpush1.msra.mxu0 0.0
        %272 = vmatprep.subr.mxu0 0.0
        %273 = vmatpush1.msra.mxu0 0.0
        %274 = vmatprep.subr.mxu0 0.0
        %275 = vmatpush1.msra.mxu0 0.0
        %276 = vmatprep.subr.mxu0 0.0
        %277 = vmatpush1.msra.mxu0 0.0
        %278 = vmatprep.subr.mxu0 0.0
        %279 = vmatpush1.msra.mxu0 0.0
        %280 = vmatprep.subr.mxu0 0.0
        %281 = vmatpush1.msra.mxu0 0.0
        %282 = vmatprep.subr.mxu0 0.0
        %283 = vmatpush1.msra.mxu0 0.0
        %284 = vmatprep.mubr.f32.mxu0 0.0
        %285 = vmatmul.mubr.f32.gmra.mrb[0].mxu0 %v197
        %v286 = vpop.f32.mrb[0].mxu0
        %v287 = vadd.f32 0.0, %v286
        %v288 = vpop.f32.mrb[0].mxu0
        %289 = vmatprep.mubr.f32.mxu0 0.0
        %290 = vmatmul.mubr.f32.gmra.mrb[0].mxu0 %v200
        %v291 = vpop.f32.mrb[0].mxu0
        %v292 = vadd.f32 0.0, %v291
        %v293 = vpop.f32.mrb[0].mxu0
        %294 = vmatprep.mubr.f32.mxu0 0.0
        %295 = vmatmul.mubr.f32.gmra.mrb[0].mxu0 %v203
        %v296 = vpop.f32.mrb[0].mxu0
        %v297 = vadd.f32 0.0, %v296
        %v298 = vpop.f32.mrb[0].mxu0
        %299 = vmatprep.mubr.f32.mxu0 0.0
        %300 = vmatmul.mubr.f32.gmra.mrb[0].mxu0 %v206
        %v301 = vpop.f32.mrb[0].mxu0
        %v302 = vadd.f32 0.0, %v301
        %v303 = vpop.f32.mrb[0].mxu0
        %304 = vmatprep.mubr.f32.mxu0 0.0
        %305 = vmatmul.mubr.f32.gmra.mrb[0].mxu0 %v209
        %v306 = vpop.f32.mrb[0].mxu0
        %v307 = vadd.f32 0.0, %v306
        %v308 = vpop.f32.mrb[0].mxu0
        %309 = vmatprep.mubr.f32.mxu0 0.0
        %310 = vmatmul.mubr.f32.gmra.mrb[0].mxu0 %v212
        %v311 = vpop.f32.mrb[0].mxu0
        %v312 = vadd.f32 0.0, %v311
        %v313 = vpop.f32.mrb[0].mxu0
        %314 = vmatprep.mubr.f32.mxu0 0.0
        %315 = vmatmul.mubr.f32.gmra.mrb[0].mxu0 %v215
        %v316 = vpop.f32.mrb[0].mxu0
        %v317 = vadd.f32 0.0, %v316
        %v318 = vpop.f32.mrb[0].mxu0
        %319 = vmatprep.mubr.f32.mxu0 0.0
        %320 = vmatmul.mubr.f32.gmra.mrb[0].mxu0 %v218
        %v321 = vpop.f32.mrb[0].mxu0
        %v322 = vadd.f32 0.0, %v321
        %v323 = vpop.f32.mrb[0].mxu0
        %324 = vdwg.mxu0
        %v326 = vsel %vm195, %v169, 0
        %v329 = vsel %vm195, %v170, 0
        %v332 = vsel %vm195, %v171, 0
        %v335 = vsel %vm195, %v172, 0
        %v338 = vsel %vm195, %v173, 0
        %v341 = vsel %vm195, %v174, 0
        %v344 = vsel %vm195, %v175, 0
        %v347 = vsel %vm195, %v176, 0
        %349 = vmatprep.subr.mxu0 0.0
        %350 = vmatpush1.msra.mxu0 %v177
        %351 = vmatprep.subr.mxu0 0.0
        %352 = vmatpush1.msra.mxu0 %v178
        %353 = vmatprep.subr.mxu0 0.0
        %354 = vmatpush1.msra.mxu0 %v179
        %355 = vmatprep.subr.mxu0 0.0
        %356 = vmatpush1.msra.mxu0 %v180
        %357 = vmatprep.subr.mxu0 0.0
        %358 = vmatpush1.msra.mxu0 0.0
        %359 = vmatprep.subr.mxu0 0.0
        %360 = vmatpush1.msra.mxu0 0.0
        %361 = vmatprep.subr.mxu0 0.0
        %362 = vmatpush1.msra.mxu0 0.0
        %363 = vmatprep.subr.mxu0 0.0
        %364 = vmatpush1.msra.mxu0 0.0
        %365 = vmatprep.subr.mxu0 0.0
        %366 = vmatpush1.msra.mxu0 0.0
        %367 = vmatprep.subr.mxu0 0.0
        %368 = vmatpush1.msra.mxu0 0.0
        %369 = vmatprep.subr.mxu0 0.0
        %370 = vmatpush1.msra.mxu0 0.0
        %371 = vmatprep.subr.mxu0 0.0
        %372 = vmatpush1.msra.mxu0 0.0
        %373 = vmatprep.subr.mxu0 0.0
        %374 = vmatpush1.msra.mxu0 0.0
        %375 = vmatprep.subr.mxu0 0.0
        %376 = vmatpush1.msra.mxu0 0.0
        %377 = vmatprep.subr.mxu0 0.0
        %378 = vmatpush1.msra.mxu0 0.0
        %379 = vmatprep.subr.mxu0 0.0
        %380 = vmatpush1.msra.mxu0 0.0
        %381 = vmatprep.subr.mxu0 0.0
        %382 = vmatpush1.msra.mxu0 0.0
        %383 = vmatprep.subr.mxu0 0.0
        %384 = vmatpush1.msra.mxu0 0.0
        %385 = vmatprep.subr.mxu0 0.0
        %386 = vmatpush1.msra.mxu0 0.0
        %387 = vmatprep.subr.mxu0 0.0
        %388 = vmatpush1.msra.mxu0 0.0
        %389 = vmatprep.subr.mxu0 0.0
        %390 = vmatpush1.msra.mxu0 0.0
        %391 = vmatprep.subr.mxu0 0.0
        %392 = vmatpush1.msra.mxu0 0.0
        %393 = vmatprep.subr.mxu0 0.0
        %394 = vmatpush1.msra.mxu0 0.0
        %395 = vmatprep.subr.mxu0 0.0
        %396 = vmatpush1.msra.mxu0 0.0
        %397 = vmatprep.subr.mxu0 0.0
        %398 = vmatpush1.msra.mxu0 0.0
        %399 = vmatprep.subr.mxu0 0.0
        %400 = vmatpush1.msra.mxu0 0.0
        %401 = vmatprep.subr.mxu0 0.0
        %402 = vmatpush1.msra.mxu0 0.0
        %403 = vmatprep.subr.mxu0 0.0
        %404 = vmatpush1.msra.mxu0 0.0
        %405 = vmatprep.subr.mxu0 0.0
        %406 = vmatpush1.msra.mxu0 0.0
        %407 = vmatprep.subr.mxu0 0.0
        %408 = vmatpush1.msra.mxu0 0.0
        %409 = vmatprep.subr.mxu0 0.0
        %410 = vmatpush1.msra.mxu0 0.0
        %411 = vmatprep.subr.mxu0 0.0
        %412 = vmatpush1.msra.mxu0 0.0
        %413 = vmatprep.mubr.f32.mxu0 0.0
        %414 = vmatmul.mubr.f32.gmra.mrb[0].mxu0 %v326
        %v415 = vpop.f32.mrb[0].mxu0
        %v416 = vadd.f32 %v287, %v415
        %v417 = vpop.f32.mrb[0].mxu0
        %418 = vmatprep.mubr.f32.mxu0 0.0
        %419 = vmatmul.mubr.f32.gmra.mrb[0].mxu0 %v329
        %v420 = vpop.f32.mrb[0].mxu0
        %v421 = vadd.f32 %v292, %v420
        %v422 = vpop.f32.mrb[0].mxu0
        %423 = vmatprep.mubr.f32.mxu0 0.0
        %424 = vmatmul.mubr.f32.gmra.mrb[0].mxu0 %v332
        %v425 = vpop.f32.mrb[0].mxu0
        %v426 = vadd.f32 %v297, %v425
        %v427 = vpop.f32.mrb[0].mxu0
        %428 = vmatprep.mubr.f32.mxu0 0.0
        %429 = vmatmul.mubr.f32.gmra.mrb[0].mxu0 %v335
        %v430 = vpop.f32.mrb[0].mxu0
        %v431 = vadd.f32 %v302, %v430
        %v432 = vpop.f32.mrb[0].mxu0
        %433 = vmatprep.mubr.f32.mxu0 0.0
        %434 = vmatmul.mubr.f32.gmra.mrb[0].mxu0 %v338
        %v435 = vpop.f32.mrb[0].mxu0
        %v436 = vadd.f32 %v307, %v435
        %v437 = vpop.f32.mrb[0].mxu0
        %438 = vmatprep.mubr.f32.mxu0 0.0
        %439 = vmatmul.mubr.f32.gmra.mrb[0].mxu0 %v341
        %v440 = vpop.f32.mrb[0].mxu0
        %v441 = vadd.f32 %v312, %v440
        %v442 = vpop.f32.mrb[0].mxu0
        %443 = vmatprep.mubr.f32.mxu0 0.0
        %444 = vmatmul.mubr.f32.gmra.mrb[0].mxu0 %v344
        %v445 = vpop.f32.mrb[0].mxu0
        %v446 = vadd.f32 %v317, %v445
        %v447 = vpop.f32.mrb[0].mxu0
        %448 = vmatprep.mubr.f32.mxu0 0.0
        %449 = vmatmul.mubr.f32.gmra.mrb[0].mxu0 %v347
        %v450 = vpop.f32.mrb[0].mxu0
        %v451 = vadd.f32 %v322, %v450
        %v452 = vpop.f32.mrb[0].mxu0
        %453 = vdwg.mxu0
        %v454 = vld [vmem:[%s168 + $0x1] sm:$0xff]
        %v455 = vld [vmem:[%s168 + $0x11] sm:$0xff]
        %v456 = vld [vmem:[%s168 + $0x21] sm:$0xff]
        %v457 = vld [vmem:[%s168 + $0x31] sm:$0xff]
        %v458 = vld [vmem:[%s168 + $0x41] sm:$0xff]
        %v459 = vld [vmem:[%s168 + $0x51] sm:$0xff]
        %v460 = vld [vmem:[%s168 + $0x61] sm:$0xff]
        %v461 = vld [vmem:[%s168 + $0x71] sm:$0xff]
        %s462 = scalar_lea.vmem %s0, 64
        %v463 = vld [vmem:[%s462] sm:$0xff]
        %v464 = vld [vmem:[%s462 + $0x8] sm:$0xff]
        %v465 = vld [vmem:[%s462 + $0x10] sm:$0xff]
        %v466 = vld [vmem:[%s462 + $0x18] sm:$0xff]
        %v468 = vsel %vm195, %v454, 0
        %v471 = vsel %vm195, %v455, 0
        %v474 = vsel %vm195, %v456, 0
        %v477 = vsel %vm195, %v457, 0
        %v480 = vsel %vm195, %v458, 0
        %v483 = vsel %vm195, %v459, 0
        %v486 = vsel %vm195, %v460, 0
        %v489 = vsel %vm195, %v461, 0
        %491 = vmatprep.subr.mxu0 0.0
        %492 = vmatpush1.msra.mxu0 %v463
        %493 = vmatprep.subr.mxu0 0.0
        %494 = vmatpush1.msra.mxu0 %v464
        %495 = vmatprep.subr.mxu0 0.0
        %496 = vmatpush1.msra.mxu0 %v465
        %497 = vmatprep.subr.mxu0 0.0
        %498 = vmatpush1.msra.mxu0 %v466
        %499 = vmatprep.subr.mxu0 0.0
        %500 = vmatpush1.msra.mxu0 0.0
        %501 = vmatprep.subr.mxu0 0.0
        %502 = vmatpush1.msra.mxu0 0.0
        %503 = vmatprep.subr.mxu0 0.0
        %504 = vmatpush1.msra.mxu0 0.0
        %505 = vmatprep.subr.mxu0 0.0
        %506 = vmatpush1.msra.mxu0 0.0
        %507 = vmatprep.subr.mxu0 0.0
        %508 = vmatpush1.msra.mxu0 0.0
        %509 = vmatprep.subr.mxu0 0.0
        %510 = vmatpush1.msra.mxu0 0.0
        %511 = vmatprep.subr.mxu0 0.0
        %512 = vmatpush1.msra.mxu0 0.0
        %513 = vmatprep.subr.mxu0 0.0
        %514 = vmatpush1.msra.mxu0 0.0
        %515 = vmatprep.subr.mxu0 0.0
        %516 = vmatpush1.msra.mxu0 0.0
        %517 = vmatprep.subr.mxu0 0.0
        %518 = vmatpush1.msra.mxu0 0.0
        %519 = vmatprep.subr.mxu0 0.0
        %520 = vmatpush1.msra.mxu0 0.0
        %521 = vmatprep.subr.mxu0 0.0
        %522 = vmatpush1.msra.mxu0 0.0
        %523 = vmatprep.subr.mxu0 0.0
        %524 = vmatpush1.msra.mxu0 0.0
        %525 = vmatprep.subr.mxu0 0.0
        %526 = vmatpush1.msra.mxu0 0.0
        %527 = vmatprep.subr.mxu0 0.0
        %528 = vmatpush1.msra.mxu0 0.0
        %529 = vmatprep.subr.mxu0 0.0
        %530 = vmatpush1.msra.mxu0 0.0
        %531 = vmatprep.subr.mxu0 0.0
        %532 = vmatpush1.msra.mxu0 0.0
        %533 = vmatprep.subr.mxu0 0.0
        %534 = vmatpush1.msra.mxu0 0.0
        %535 = vmatprep.subr.mxu0 0.0
        %536 = vmatpush1.msra.mxu0 0.0
        %537 = vmatprep.subr.mxu0 0.0
        %538 = vmatpush1.msra.mxu0 0.0
        %539 = vmatprep.subr.mxu0 0.0
        %540 = vmatpush1.msra.mxu0 0.0
        %541 = vmatprep.subr.mxu0 0.0
        %542 = vmatpush1.msra.mxu0 0.0
        %543 = vmatprep.subr.mxu0 0.0
        %544 = vmatpush1.msra.mxu0 0.0
        %545 = vmatprep.subr.mxu0 0.0
        %546 = vmatpush1.msra.mxu0 0.0
        %547 = vmatprep.subr.mxu0 0.0
        %548 = vmatpush1.msra.mxu0 0.0
        %549 = vmatprep.subr.mxu0 0.0
        %550 = vmatpush1.msra.mxu0 0.0
        %551 = vmatprep.subr.mxu0 0.0
        %552 = vmatpush1.msra.mxu0 0.0
        %553 = vmatprep.subr.mxu0 0.0
        %554 = vmatpush1.msra.mxu0 0.0
        %555 = vmatprep.mubr.f32.mxu0 0.0
        %556 = vmatmul.mubr.f32.gmra.mrb[0].mxu0 %v468
        %v557 = vpop.f32.mrb[0].mxu0
        %v558 = vadd.f32 0.0, %v557
        %v559 = vpop.f32.mrb[0].mxu0
        %560 = vmatprep.mubr.f32.mxu0 0.0
        %561 = vmatmul.mubr.f32.gmra.mrb[0].mxu0 %v471
        %v562 = vpop.f32.mrb[0].mxu0
        %v563 = vadd.f32 0.0, %v562
        %v564 = vpop.f32.mrb[0].mxu0
        %565 = vmatprep.mubr.f32.mxu0 0.0
        %566 = vmatmul.mubr.f32.gmra.mrb[0].mxu0 %v474
        %v567 = vpop.f32.mrb[0].mxu0
        %v568 = vadd.f32 0.0, %v567
        %v569 = vpop.f32.mrb[0].mxu0
        %570 = vmatprep.mubr.f32.mxu0 0.0
        %571 = vmatmul.mubr.f32.gmra.mrb[0].mxu0 %v477
        %v572 = vpop.f32.mrb[0].mxu0
        %v573 = vadd.f32 0.0, %v572
        %v574 = vpop.f32.mrb[0].mxu0
        %575 = vmatprep.mubr.f32.mxu0 0.0
        %576 = vmatmul.mubr.f32.gmra.mrb[0].mxu0 %v480
        %v577 = vpop.f32.mrb[0].mxu0
        %v578 = vadd.f32 0.0, %v577
        %v579 = vpop.f32.mrb[0].mxu0
        %580 = vmatprep.mubr.f32.mxu0 0.0
        %581 = vmatmul.mubr.f32.gmra.mrb[0].mxu0 %v483
        %v582 = vpop.f32.mrb[0].mxu0
        %v583 = vadd.f32 0.0, %v582
        %v584 = vpop.f32.mrb[0].mxu0
        %585 = vmatprep.mubr.f32.mxu0 0.0
        %586 = vmatmul.mubr.f32.gmra.mrb[0].mxu0 %v486
        %v587 = vpop.f32.mrb[0].mxu0
        %v588 = vadd.f32 0.0, %v587
        %v589 = vpop.f32.mrb[0].mxu0
        %590 = vmatprep.mubr.f32.mxu0 0.0
        %591 = vmatmul.mubr.f32.gmra.mrb[0].mxu0 %v489
        %v592 = vpop.f32.mrb[0].mxu0
        %v593 = vadd.f32 0.0, %v592
        %v594 = vpop.f32.mrb[0].mxu0
        %595 = vdwg.mxu0
        %v596 = vadd.f32 %v416, %v558
        %v597 = vadd.f32 %v421, %v563
        %v598 = vadd.f32 %v426, %v568
        %v599 = vadd.f32 %v431, %v573
        %v600 = vadd.f32 %v436, %v578
        %v601 = vadd.f32 %v441, %v583
        %v602 = vadd.f32 %v446, %v588
        %v603 = vadd.f32 %v451, %v593
        %s604 = scalar_lea.vmem %s168, 288
        %v605 = vld [vmem:[%s604] sm:$0xff]
        %v606 = vld [vmem:[%s604 + $0x10] sm:$0xff]
        %v607 = vld [vmem:[%s604 + $0x20] sm:$0xff]
        %v608 = vld [vmem:[%s604 + $0x30] sm:$0xff]
        %v609 = vld [vmem:[%s604 + $0x40] sm:$0xff]
        %v610 = vld [vmem:[%s604 + $0x50] sm:$0xff]
        %v611 = vld [vmem:[%s604 + $0x60] sm:$0xff]
        %v612 = vld [vmem:[%s604 + $0x70] sm:$0xff]
        %s613 = scalar_lea.vmem %s0, 96
        %v614 = vld [vmem:[%s613] sm:$0xff]
        %v615 = vld [vmem:[%s613 + $0x8] sm:$0xff]
        %v616 = vld [vmem:[%s613 + $0x10] sm:$0xff]
        %v617 = vld [vmem:[%s613 + $0x18] sm:$0xff]
        %v619 = vsel %vm195, %v605, 0
        %v622 = vsel %vm195, %v606, 0
        %v625 = vsel %vm195, %v607, 0
        %v628 = vsel %vm195, %v608, 0
        %v631 = vsel %vm195, %v609, 0
        %v634 = vsel %vm195, %v610, 0
        %v637 = vsel %vm195, %v611, 0
        %v640 = vsel %vm195, %v612, 0
        %642 = vmatprep.subr.mxu0 0.0
        %643 = vmatpush1.msra.mxu0 %v614
        %644 = vmatprep.subr.mxu0 0.0
        %645 = vmatpush1.msra.mxu0 %v615
        %646 = vmatprep.subr.mxu0 0.0
        %647 = vmatpush1.msra.mxu0 %v616
        %648 = vmatprep.subr.mxu0 0.0
        %649 = vmatpush1.msra.mxu0 %v617
        %650 = vmatprep.subr.mxu0 0.0
        %651 = vmatpush1.msra.mxu0 0.0
        %652 = vmatprep.subr.mxu0 0.0
        %653 = vmatpush1.msra.mxu0 0.0
        %654 = vmatprep.subr.mxu0 0.0
        %655 = vmatpush1.msra.mxu0 0.0
        %656 = vmatprep.subr.mxu0 0.0
        %657 = vmatpush1.msra.mxu0 0.0
        %658 = vmatprep.subr.mxu0 0.0
        %659 = vmatpush1.msra.mxu0 0.0
        %660 = vmatprep.subr.mxu0 0.0
        %661 = vmatpush1.msra.mxu0 0.0
        %662 = vmatprep.subr.mxu0 0.0
        %663 = vmatpush1.msra.mxu0 0.0
        %664 = vmatprep.subr.mxu0 0.0
        %665 = vmatpush1.msra.mxu0 0.0
        %666 = vmatprep.subr.mxu0 0.0
        %667 = vmatpush1.msra.mxu0 0.0
        %668 = vmatprep.subr.mxu0 0.0
        %669 = vmatpush1.msra.mxu0 0.0
        %670 = vmatprep.subr.mxu0 0.0
        %671 = vmatpush1.msra.mxu0 0.0
        %672 = vmatprep.subr.mxu0 0.0
        %673 = vmatpush1.msra.mxu0 0.0
        %674 = vmatprep.subr.mxu0 0.0
        %675 = vmatpush1.msra.mxu0 0.0
        %676 = vmatprep.subr.mxu0 0.0
        %677 = vmatpush1.msra.mxu0 0.0
        %678 = vmatprep.subr.mxu0 0.0
        %679 = vmatpush1.msra.mxu0 0.0
        %680 = vmatprep.subr.mxu0 0.0
        %681 = vmatpush1.msra.mxu0 0.0
        %682 = vmatprep.subr.mxu0 0.0
        %683 = vmatpush1.msra.mxu0 0.0
        %684 = vmatprep.subr.mxu0 0.0
        %685 = vmatpush1.msra.mxu0 0.0
        %686 = vmatprep.subr.mxu0 0.0
        %687 = vmatpush1.msra.mxu0 0.0
        %688 = vmatprep.subr.mxu0 0.0
        %689 = vmatpush1.msra.mxu0 0.0
        %690 = vmatprep.subr.mxu0 0.0
        %691 = vmatpush1.msra.mxu0 0.0
        %692 = vmatprep.subr.mxu0 0.0
        %693 = vmatpush1.msra.mxu0 0.0
        %694 = vmatprep.subr.mxu0 0.0
        %695 = vmatpush1.msra.mxu0 0.0
        %696 = vmatprep.subr.mxu0 0.0
        %697 = vmatpush1.msra.mxu0 0.0
        %698 = vmatprep.subr.mxu0 0.0
        %699 = vmatpush1.msra.mxu0 0.0
        %700 = vmatprep.subr.mxu0 0.0
        %701 = vmatpush1.msra.mxu0 0.0
        %702 = vmatprep.subr.mxu0 0.0
        %703 = vmatpush1.msra.mxu0 0.0
        %704 = vmatprep.subr.mxu0 0.0
        %705 = vmatpush1.msra.mxu0 0.0
        %706 = vmatprep.mubr.f32.mxu0 0.0
        %707 = vmatmul.mubr.f32.gmra.mrb[0].mxu0 %v619
        %v708 = vpop.f32.mrb[0].mxu0
        %v709 = vadd.f32 0.0, %v708
        %v710 = vpop.f32.mrb[0].mxu0
        %711 = vmatprep.mubr.f32.mxu0 0.0
        %712 = vmatmul.mubr.f32.gmra.mrb[0].mxu0 %v622
        %v713 = vpop.f32.mrb[0].mxu0
        %v714 = vadd.f32 0.0, %v713
        %v715 = vpop.f32.mrb[0].mxu0
        %716 = vmatprep.mubr.f32.mxu0 0.0
        %717 = vmatmul.mubr.f32.gmra.mrb[0].mxu0 %v625
        %v718 = vpop.f32.mrb[0].mxu0
        %v719 = vadd.f32 0.0, %v718
        %v720 = vpop.f32.mrb[0].mxu0
        %721 = vmatprep.mubr.f32.mxu0 0.0
        %722 = vmatmul.mubr.f32.gmra.mrb[0].mxu0 %v628
        %v723 = vpop.f32.mrb[0].mxu0
        %v724 = vadd.f32 0.0, %v723
        %v725 = vpop.f32.mrb[0].mxu0
        %726 = vmatprep.mubr.f32.mxu0 0.0
        %727 = vmatmul.mubr.f32.gmra.mrb[0].mxu0 %v631
        %v728 = vpop.f32.mrb[0].mxu0
        %v729 = vadd.f32 0.0, %v728
        %v730 = vpop.f32.mrb[0].mxu0
        %731 = vmatprep.mubr.f32.mxu0 0.0
        %732 = vmatmul.mubr.f32.gmra.mrb[0].mxu0 %v634
        %v733 = vpop.f32.mrb[0].mxu0
        %v734 = vadd.f32 0.0, %v733
        %v735 = vpop.f32.mrb[0].mxu0
        %736 = vmatprep.mubr.f32.mxu0 0.0
        %737 = vmatmul.mubr.f32.gmra.mrb[0].mxu0 %v637
        %v738 = vpop.f32.mrb[0].mxu0
        %v739 = vadd.f32 0.0, %v738
        %v740 = vpop.f32.mrb[0].mxu0
        %741 = vmatprep.mubr.f32.mxu0 0.0
        %742 = vmatmul.mubr.f32.gmra.mrb[0].mxu0 %v640
        %v743 = vpop.f32.mrb[0].mxu0
        %v744 = vadd.f32 0.0, %v743
        %v745 = vpop.f32.mrb[0].mxu0
        %746 = vdwg.mxu0
        %v747 = vadd.f32 %v596, %v709
        %v748 = vadd.f32 %v597, %v714
        %v749 = vadd.f32 %v598, %v719
        %v750 = vadd.f32 %v599, %v724
        %v751 = vadd.f32 %v600, %v729
        %v752 = vadd.f32 %v601, %v734
        %v753 = vadd.f32 %v602, %v739
        %v754 = vadd.f32 %v603, %v744
        %s755 = scalar_lea.vmem %s168, 432
        %v756 = vld [vmem:[%s755] sm:$0xff]
        %v757 = vld [vmem:[%s755 + $0x10] sm:$0xff]
        %v758 = vld [vmem:[%s755 + $0x20] sm:$0xff]
        %v759 = vld [vmem:[%s755 + $0x30] sm:$0xff]
        %v760 = vld [vmem:[%s755 + $0x40] sm:$0xff]
        %v761 = vld [vmem:[%s755 + $0x50] sm:$0xff]
        %v762 = vld [vmem:[%s755 + $0x60] sm:$0xff]
        %v763 = vld [vmem:[%s755 + $0x70] sm:$0xff]
        %s764 = scalar_lea.vmem %s0, 128
        %v765 = vld [vmem:[%s764] sm:$0xff]
        %v766 = vld [vmem:[%s764 + $0x8] sm:$0xff]
        %v767 = vld [vmem:[%s764 + $0x10] sm:$0xff]
        %v768 = vld [vmem:[%s764 + $0x18] sm:$0xff]
        %v770 = vsel %vm195, %v756, 0
        %v773 = vsel %vm195, %v757, 0
        %v776 = vsel %vm195, %v758, 0
        %v779 = vsel %vm195, %v759, 0
        %v782 = vsel %vm195, %v760, 0
        %v785 = vsel %vm195, %v761, 0
        %v788 = vsel %vm195, %v762, 0
        %v791 = vsel %vm195, %v763, 0
        %793 = vmatprep.subr.mxu0 0.0
        %794 = vmatpush1.msra.mxu0 %v765
        %795 = vmatprep.subr.mxu0 0.0
        %796 = vmatpush1.msra.mxu0 %v766
        %797 = vmatprep.subr.mxu0 0.0
        %798 = vmatpush1.msra.mxu0 %v767
        %799 = vmatprep.subr.mxu0 0.0
        %800 = vmatpush1.msra.mxu0 %v768
        %801 = vmatprep.subr.mxu0 0.0
        %802 = vmatpush1.msra.mxu0 0.0
        %803 = vmatprep.subr.mxu0 0.0
        %804 = vmatpush1.msra.mxu0 0.0
        %805 = vmatprep.subr.mxu0 0.0
        %806 = vmatpush1.msra.mxu0 0.0
        %807 = vmatprep.subr.mxu0 0.0
        %808 = vmatpush1.msra.mxu0 0.0
        %809 = vmatprep.subr.mxu0 0.0
        %810 = vmatpush1.msra.mxu0 0.0
        %811 = vmatprep.subr.mxu0 0.0
        %812 = vmatpush1.msra.mxu0 0.0
        %813 = vmatprep.subr.mxu0 0.0
        %814 = vmatpush1.msra.mxu0 0.0
        %815 = vmatprep.subr.mxu0 0.0
        %816 = vmatpush1.msra.mxu0 0.0
        %817 = vmatprep.subr.mxu0 0.0
        %818 = vmatpush1.msra.mxu0 0.0
        %819 = vmatprep.subr.mxu0 0.0
        %820 = vmatpush1.msra.mxu0 0.0
        %821 = vmatprep.subr.mxu0 0.0
        %822 = vmatpush1.msra.mxu0 0.0
        %823 = vmatprep.subr.mxu0 0.0
        %824 = vmatpush1.msra.mxu0 0.0
        %825 = vmatprep.subr.mxu0 0.0
        %826 = vmatpush1.msra.mxu0 0.0
        %827 = vmatprep.subr.mxu0 0.0
        %828 = vmatpush1.msra.mxu0 0.0
        %829 = vmatprep.subr.mxu0 0.0
        %830 = vmatpush1.msra.mxu0 0.0
        %831 = vmatprep.subr.mxu0 0.0
        %832 = vmatpush1.msra.mxu0 0.0
        %833 = vmatprep.subr.mxu0 0.0
        %834 = vmatpush1.msra.mxu0 0.0
        %835 = vmatprep.subr.mxu0 0.0
        %836 = vmatpush1.msra.mxu0 0.0
        %837 = vmatprep.subr.mxu0 0.0
        %838 = vmatpush1.msra.mxu0 0.0
        %839 = vmatprep.subr.mxu0 0.0
        %840 = vmatpush1.msra.mxu0 0.0
        %841 = vmatprep.subr.mxu0 0.0
        %842 = vmatpush1.msra.mxu0 0.0
        %843 = vmatprep.subr.mxu0 0.0
        %844 = vmatpush1.msra.mxu0 0.0
        %845 = vmatprep.subr.mxu0 0.0
        %846 = vmatpush1.msra.mxu0 0.0
        %847 = vmatprep.subr.mxu0 0.0
        %848 = vmatpush1.msra.mxu0 0.0
        %849 = vmatprep.subr.mxu0 0.0
        %850 = vmatpush1.msra.mxu0 0.0
        %851 = vmatprep.subr.mxu0 0.0
        %852 = vmatpush1.msra.mxu0 0.0
        %853 = vmatprep.subr.mxu0 0.0
        %854 = vmatpush1.msra.mxu0 0.0
        %855 = vmatprep.subr.mxu0 0.0
        %856 = vmatpush1.msra.mxu0 0.0
        %857 = vmatprep.mubr.f32.mxu0 0.0
        %858 = vmatmul.mubr.f32.gmra.mrb[0].mxu0 %v770
        %v859 = vpop.f32.mrb[0].mxu0
        %v860 = vadd.f32 0.0, %v859
        %v861 = vpop.f32.mrb[0].mxu0
        %862 = vmatprep.mubr.f32.mxu0 0.0
        %863 = vmatmul.mubr.f32.gmra.mrb[0].mxu0 %v773
        %v864 = vpop.f32.mrb[0].mxu0
        %v865 = vadd.f32 0.0, %v864
        %v866 = vpop.f32.mrb[0].mxu0
        %867 = vmatprep.mubr.f32.mxu0 0.0
        %868 = vmatmul.mubr.f32.gmra.mrb[0].mxu0 %v776
        %v869 = vpop.f32.mrb[0].mxu0
        %v870 = vadd.f32 0.0, %v869
        %v871 = vpop.f32.mrb[0].mxu0
        %872 = vmatprep.mubr.f32.mxu0 0.0
        %873 = vmatmul.mubr.f32.gmra.mrb[0].mxu0 %v779
        %v874 = vpop.f32.mrb[0].mxu0
        %v875 = vadd.f32 0.0, %v874
        %v876 = vpop.f32.mrb[0].mxu0
        %877 = vmatprep.mubr.f32.mxu0 0.0
        %878 = vmatmul.mubr.f32.gmra.mrb[0].mxu0 %v782
        %v879 = vpop.f32.mrb[0].mxu0
        %v880 = vadd.f32 0.0, %v879
        %v881 = vpop.f32.mrb[0].mxu0
        %882 = vmatprep.mubr.f32.mxu0 0.0
        %883 = vmatmul.mubr.f32.gmra.mrb[0].mxu0 %v785
        %v884 = vpop.f32.mrb[0].mxu0
        %v885 = vadd.f32 0.0, %v884
        %v886 = vpop.f32.mrb[0].mxu0
        %887 = vmatprep.mubr.f32.mxu0 0.0
        %888 = vmatmul.mubr.f32.gmra.mrb[0].mxu0 %v788
        %v889 = vpop.f32.mrb[0].mxu0
        %v890 = vadd.f32 0.0, %v889
        %v891 = vpop.f32.mrb[0].mxu0
        %892 = vmatprep.mubr.f32.mxu0 0.0
        %893 = vmatmul.mubr.f32.gmra.mrb[0].mxu0 %v791
        %v894 = vpop.f32.mrb[0].mxu0
        %v895 = vadd.f32 0.0, %v894
        %v896 = vpop.f32.mrb[0].mxu0
        %897 = vdwg.mxu0
        %v898 = vadd.f32 %v747, %v860
        %v899 = vadd.f32 %v748, %v865
        %v900 = vadd.f32 %v749, %v870
        %v901 = vadd.f32 %v750, %v875
        %v902 = vadd.f32 %v751, %v880
        %v903 = vadd.f32 %v752, %v885
        %v904 = vadd.f32 %v753, %v890
        %v905 = vadd.f32 %v754, %v895
        %v906 = vld [vmem:[%s604 + $0x1] sm:$0xff]
        %v907 = vld [vmem:[%s604 + $0x11] sm:$0xff]
        %v908 = vld [vmem:[%s604 + $0x21] sm:$0xff]
        %v909 = vld [vmem:[%s604 + $0x31] sm:$0xff]
        %v910 = vld [vmem:[%s604 + $0x41] sm:$0xff]
        %v911 = vld [vmem:[%s604 + $0x51] sm:$0xff]
        %v912 = vld [vmem:[%s604 + $0x61] sm:$0xff]
        %v913 = vld [vmem:[%s604 + $0x71] sm:$0xff]
        %s914 = scalar_lea.vmem %s0, 160
        %v915 = vld [vmem:[%s914] sm:$0xff]
        %v916 = vld [vmem:[%s914 + $0x8] sm:$0xff]
        %v917 = vld [vmem:[%s914 + $0x10] sm:$0xff]
        %v918 = vld [vmem:[%s914 + $0x18] sm:$0xff]
        %v920 = vsel %vm195, %v906, 0
        %v923 = vsel %vm195, %v907, 0
        %v926 = vsel %vm195, %v908, 0
        %v929 = vsel %vm195, %v909, 0
        %v932 = vsel %vm195, %v910, 0
        %v935 = vsel %vm195, %v911, 0
        %v938 = vsel %vm195, %v912, 0
        %v941 = vsel %vm195, %v913, 0
        %943 = vmatprep.subr.mxu0 0.0
        %944 = vmatpush1.msra.mxu0 %v915
        %945 = vmatprep.subr.mxu0 0.0
        %946 = vmatpush1.msra.mxu0 %v916
        %947 = vmatprep.subr.mxu0 0.0
        %948 = vmatpush1.msra.mxu0 %v917
        %949 = vmatprep.subr.mxu0 0.0
        %950 = vmatpush1.msra.mxu0 %v918
        %951 = vmatprep.subr.mxu0 0.0
        %952 = vmatpush1.msra.mxu0 0.0
        %953 = vmatprep.subr.mxu0 0.0
        %954 = vmatpush1.msra.mxu0 0.0
        %955 = vmatprep.subr.mxu0 0.0
        %956 = vmatpush1.msra.mxu0 0.0
        %957 = vmatprep.subr.mxu0 0.0
        %958 = vmatpush1.msra.mxu0 0.0
        %959 = vmatprep.subr.mxu0 0.0
        %960 = vmatpush1.msra.mxu0 0.0
        %961 = vmatprep.subr.mxu0 0.0
        %962 = vmatpush1.msra.mxu0 0.0
        %963 = vmatprep.subr.mxu0 0.0
        %964 = vmatpush1.msra.mxu0 0.0
        %965 = vmatprep.subr.mxu0 0.0
        %966 = vmatpush1.msra.mxu0 0.0
        %967 = vmatprep.subr.mxu0 0.0
        %968 = vmatpush1.msra.mxu0 0.0
        %969 = vmatprep.subr.mxu0 0.0
        %970 = vmatpush1.msra.mxu0 0.0
        %971 = vmatprep.subr.mxu0 0.0
        %972 = vmatpush1.msra.mxu0 0.0
        %973 = vmatprep.subr.mxu0 0.0
        %974 = vmatpush1.msra.mxu0 0.0
        %975 = vmatprep.subr.mxu0 0.0
        %976 = vmatpush1.msra.mxu0 0.0
        %977 = vmatprep.subr.mxu0 0.0
        %978 = vmatpush1.msra.mxu0 0.0
        %979 = vmatprep.subr.mxu0 0.0
        %980 = vmatpush1.msra.mxu0 0.0
        %981 = vmatprep.subr.mxu0 0.0
        %982 = vmatpush1.msra.mxu0 0.0
        %983 = vmatprep.subr.mxu0 0.0
        %984 = vmatpush1.msra.mxu0 0.0
        %985 = vmatprep.subr.mxu0 0.0
        %986 = vmatpush1.msra.mxu0 0.0
        %987 = vmatprep.subr.mxu0 0.0
        %988 = vmatpush1.msra.mxu0 0.0
        %989 = vmatprep.subr.mxu0 0.0
        %990 = vmatpush1.msra.mxu0 0.0
        %991 = vmatprep.subr.mxu0 0.0
        %992 = vmatpush1.msra.mxu0 0.0
        %993 = vmatprep.subr.mxu0 0.0
        %994 = vmatpush1.msra.mxu0 0.0
        %995 = vmatprep.subr.mxu0 0.0
        %996 = vmatpush1.msra.mxu0 0.0
        %997 = vmatprep.subr.mxu0 0.0
        %998 = vmatpush1.msra.mxu0 0.0
        %999 = vmatprep.subr.mxu0 0.0
        %1000 = vmatpush1.msra.mxu0 0.0
        %1001 = vmatprep.subr.mxu0 0.0
        %1002 = vmatpush1.msra.mxu0 0.0
        %1003 = vmatprep.subr.mxu0 0.0
        %1004 = vmatpush1.msra.mxu0 0.0
        %1005 = vmatprep.subr.mxu0 0.0
        %1006 = vmatpush1.msra.mxu0 0.0
        %1007 = vmatprep.mubr.f32.mxu0 0.0
        %1008 = vmatmul.mubr.f32.gmra.mrb[0].mxu0 %v920
        %v1009 = vpop.f32.mrb[0].mxu0
        %v1010 = vadd.f32 0.0, %v1009
        %v1011 = vpop.f32.mrb[0].mxu0
        %1012 = vmatprep.mubr.f32.mxu0 0.0
        %1013 = vmatmul.mubr.f32.gmra.mrb[0].mxu0 %v923
        %v1014 = vpop.f32.mrb[0].mxu0
        %v1015 = vadd.f32 0.0, %v1014
        %v1016 = vpop.f32.mrb[0].mxu0
        %1017 = vmatprep.mubr.f32.mxu0 0.0
        %1018 = vmatmul.mubr.f32.gmra.mrb[0].mxu0 %v926
        %v1019 = vpop.f32.mrb[0].mxu0
        %v1020 = vadd.f32 0.0, %v1019
        %v1021 = vpop.f32.mrb[0].mxu0
        %1022 = vmatprep.mubr.f32.mxu0 0.0
        %1023 = vmatmul.mubr.f32.gmra.mrb[0].mxu0 %v929
        %v1024 = vpop.f32.mrb[0].mxu0
        %v1025 = vadd.f32 0.0, %v1024
        %v1026 = vpop.f32.mrb[0].mxu0
        %1027 = vmatprep.mubr.f32.mxu0 0.0
        %1028 = vmatmul.mubr.f32.gmra.mrb[0].mxu0 %v932
        %v1029 = vpop.f32.mrb[0].mxu0
        %v1030 = vadd.f32 0.0, %v1029
        %v1031 = vpop.f32.mrb[0].mxu0
        %1032 = vmatprep.mubr.f32.mxu0 0.0
        %1033 = vmatmul.mubr.f32.gmra.mrb[0].mxu0 %v935
        %v1034 = vpop.f32.mrb[0].mxu0
        %v1035 = vadd.f32 0.0, %v1034
        %v1036 = vpop.f32.mrb[0].mxu0
        %1037 = vmatprep.mubr.f32.mxu0 0.0
        %1038 = vmatmul.mubr.f32.gmra.mrb[0].mxu0 %v938
        %v1039 = vpop.f32.mrb[0].mxu0
        %v1040 = vadd.f32 0.0, %v1039
        %v1041 = vpop.f32.mrb[0].mxu0
        %1042 = vmatprep.mubr.f32.mxu0 0.0
        %1043 = vmatmul.mubr.f32.gmra.mrb[0].mxu0 %v941
        %v1044 = vpop.f32.mrb[0].mxu0
        %v1045 = vadd.f32 0.0, %v1044
        %v1046 = vpop.f32.mrb[0].mxu0
        %1047 = vdwg.mxu0
        %v1048 = vadd.f32 %v898, %v1010
        %v1049 = vadd.f32 %v899, %v1015
        %v1050 = vadd.f32 %v900, %v1020
        %v1051 = vadd.f32 %v901, %v1025
        %v1052 = vadd.f32 %v902, %v1030
        %v1053 = vadd.f32 %v903, %v1035
        %v1054 = vadd.f32 %v904, %v1040
        %v1055 = vadd.f32 %v905, %v1045
        %s1056 = scalar_lea.vmem %s168, 16
        %v1057 = vld [vmem:[%s1056] sm:$0xff]
        %v1058 = vld [vmem:[%s1056 + $0x10] sm:$0xff]
        %v1059 = vld [vmem:[%s1056 + $0x20] sm:$0xff]
        %v1060 = vld [vmem:[%s1056 + $0x30] sm:$0xff]
        %v1061 = vld [vmem:[%s1056 + $0x40] sm:$0xff]
        %v1062 = vld [vmem:[%s1056 + $0x50] sm:$0xff]
        %v1063 = vld [vmem:[%s1056 + $0x60] sm:$0xff]
        %v1064 = vld [vmem:[%s1056 + $0x70] sm:$0xff]
        %s1065 = scalar_lea.vmem %s0, 192
        %v1066 = vld [vmem:[%s1065] sm:$0xff]
        %v1067 = vld [vmem:[%s1065 + $0x8] sm:$0xff]
        %v1068 = vld [vmem:[%s1065 + $0x10] sm:$0xff]
        %v1069 = vld [vmem:[%s1065 + $0x18] sm:$0xff]
        %v1071 = vsel %vm195, %v1057, 0
        %v1074 = vsel %vm195, %v1058, 0
        %v1077 = vsel %vm195, %v1059, 0
        %v1080 = vsel %vm195, %v1060, 0
        %v1083 = vsel %vm195, %v1061, 0
        %v1086 = vsel %vm195, %v1062, 0
        %v1089 = vsel %vm195, %v1063, 0
        %v1092 = vsel %vm195, %v1064, 0
        %1094 = vmatprep.subr.mxu0 0.0
        %1095 = vmatpush1.msra.mxu0 %v1066
        %1096 = vmatprep.subr.mxu0 0.0
        %1097 = vmatpush1.msra.mxu0 %v1067
        %1098 = vmatprep.subr.mxu0 0.0
        %1099 = vmatpush1.msra.mxu0 %v1068
        %1100 = vmatprep.subr.mxu0 0.0
        %1101 = vmatpush1.msra.mxu0 %v1069
        %1102 = vmatprep.subr.mxu0 0.0
        %1103 = vmatpush1.msra.mxu0 0.0
        %1104 = vmatprep.subr.mxu0 0.0
        %1105 = vmatpush1.msra.mxu0 0.0
        %1106 = vmatprep.subr.mxu0 0.0
        %1107 = vmatpush1.msra.mxu0 0.0
        %1108 = vmatprep.subr.mxu0 0.0
        %1109 = vmatpush1.msra.mxu0 0.0
        %1110 = vmatprep.subr.mxu0 0.0
        %1111 = vmatpush1.msra.mxu0 0.0
        %1112 = vmatprep.subr.mxu0 0.0
        %1113 = vmatpush1.msra.mxu0 0.0
        %1114 = vmatprep.subr.mxu0 0.0
        %1115 = vmatpush1.msra.mxu0 0.0
        %1116 = vmatprep.subr.mxu0 0.0
        %1117 = vmatpush1.msra.mxu0 0.0
        %1118 = vmatprep.subr.mxu0 0.0
        %1119 = vmatpush1.msra.mxu0 0.0
        %1120 = vmatprep.subr.mxu0 0.0
        %1121 = vmatpush1.msra.mxu0 0.0
        %1122 = vmatprep.subr.mxu0 0.0
        %1123 = vmatpush1.msra.mxu0 0.0
        %1124 = vmatprep.subr.mxu0 0.0
        %1125 = vmatpush1.msra.mxu0 0.0
        %1126 = vmatprep.subr.mxu0 0.0
        %1127 = vmatpush1.msra.mxu0 0.0
        %1128 = vmatprep.subr.mxu0 0.0
        %1129 = vmatpush1.msra.mxu0 0.0
        %1130 = vmatprep.subr.mxu0 0.0
        %1131 = vmatpush1.msra.mxu0 0.0
        %1132 = vmatprep.subr.mxu0 0.0
        %1133 = vmatpush1.msra.mxu0 0.0
        %1134 = vmatprep.subr.mxu0 0.0
        %1135 = vmatpush1.msra.mxu0 0.0
        %1136 = vmatprep.subr.mxu0 0.0
        %1137 = vmatpush1.msra.mxu0 0.0
        %1138 = vmatprep.subr.mxu0 0.0
        %1139 = vmatpush1.msra.mxu0 0.0
        %1140 = vmatprep.subr.mxu0 0.0
        %1141 = vmatpush1.msra.mxu0 0.0
        %1142 = vmatprep.subr.mxu0 0.0
        %1143 = vmatpush1.msra.mxu0 0.0
        %1144 = vmatprep.subr.mxu0 0.0
        %1145 = vmatpush1.msra.mxu0 0.0
        %1146 = vmatprep.subr.mxu0 0.0
        %1147 = vmatpush1.msra.mxu0 0.0
        %1148 = vmatprep.subr.mxu0 0.0
        %1149 = vmatpush1.msra.mxu0 0.0
        %1150 = vmatprep.subr.mxu0 0.0
        %1151 = vmatpush1.msra.mxu0 0.0
        %1152 = vmatprep.subr.mxu0 0.0
        %1153 = vmatpush1.msra.mxu0 0.0
        %1154 = vmatprep.subr.mxu0 0.0
        %1155 = vmatpush1.msra.mxu0 0.0
        %1156 = vmatprep.subr.mxu0 0.0
        %1157 = vmatpush1.msra.mxu0 0.0
        %1158 = vmatprep.mubr.f32.mxu0 0.0
        %1159 = vmatmul.mubr.f32.gmra.mrb[0].mxu0 %v1071
        %v1160 = vpop.f32.mrb[0].mxu0
        %v1161 = vadd.f32 0.0, %v1160
        %v1162 = vpop.f32.mrb[0].mxu0
        %1163 = vmatprep.mubr.f32.mxu0 0.0
        %1164 = vmatmul.mubr.f32.gmra.mrb[0].mxu0 %v1074
        %v1165 = vpop.f32.mrb[0].mxu0
        %v1166 = vadd.f32 0.0, %v1165
        %v1167 = vpop.f32.mrb[0].mxu0
        %1168 = vmatprep.mubr.f32.mxu0 0.0
        %1169 = vmatmul.mubr.f32.gmra.mrb[0].mxu0 %v1077
        %v1170 = vpop.f32.mrb[0].mxu0
        %v1171 = vadd.f32 0.0, %v1170
        %v1172 = vpop.f32.mrb[0].mxu0
        %1173 = vmatprep.mubr.f32.mxu0 0.0
        %1174 = vmatmul.mubr.f32.gmra.mrb[0].mxu0 %v1080
        %v1175 = vpop.f32.mrb[0].mxu0
        %v1176 = vadd.f32 0.0, %v1175
        %v1177 = vpop.f32.mrb[0].mxu0
        %1178 = vmatprep.mubr.f32.mxu0 0.0
        %1179 = vmatmul.mubr.f32.gmra.mrb[0].mxu0 %v1083
        %v1180 = vpop.f32.mrb[0].mxu0
        %v1181 = vadd.f32 0.0, %v1180
        %v1182 = vpop.f32.mrb[0].mxu0
        %1183 = vmatprep.mubr.f32.mxu0 0.0
        %1184 = vmatmul.mubr.f32.gmra.mrb[0].mxu0 %v1086
        %v1185 = vpop.f32.mrb[0].mxu0
        %v1186 = vadd.f32 0.0, %v1185
        %v1187 = vpop.f32.mrb[0].mxu0
        %1188 = vmatprep.mubr.f32.mxu0 0.0
        %1189 = vmatmul.mubr.f32.gmra.mrb[0].mxu0 %v1089
        %v1190 = vpop.f32.mrb[0].mxu0
        %v1191 = vadd.f32 0.0, %v1190
        %v1192 = vpop.f32.mrb[0].mxu0
        %1193 = vmatprep.mubr.f32.mxu0 0.0
        %1194 = vmatmul.mubr.f32.gmra.mrb[0].mxu0 %v1092
        %v1195 = vpop.f32.mrb[0].mxu0
        %v1196 = vadd.f32 0.0, %v1195
        %v1197 = vpop.f32.mrb[0].mxu0
        %1198 = vdwg.mxu0
        %v1199 = vadd.f32 %v1048, %v1161
        %v1200 = vadd.f32 %v1049, %v1166
        %v1201 = vadd.f32 %v1050, %v1171
        %v1202 = vadd.f32 %v1051, %v1176
        %v1203 = vadd.f32 %v1052, %v1181
        %v1204 = vadd.f32 %v1053, %v1186
        %v1205 = vadd.f32 %v1054, %v1191
        %v1206 = vadd.f32 %v1055, %v1196
        %s1207 = scalar_lea.vmem %s168, 160
        %v1208 = vld [vmem:[%s1207] sm:$0xff]
        %v1209 = vld [vmem:[%s1207 + $0x10] sm:$0xff]
        %v1210 = vld [vmem:[%s1207 + $0x20] sm:$0xff]
        %v1211 = vld [vmem:[%s1207 + $0x30] sm:$0xff]
        %v1212 = vld [vmem:[%s1207 + $0x40] sm:$0xff]
        %v1213 = vld [vmem:[%s1207 + $0x50] sm:$0xff]
        %v1214 = vld [vmem:[%s1207 + $0x60] sm:$0xff]
        %v1215 = vld [vmem:[%s1207 + $0x70] sm:$0xff]
        %s1216 = scalar_lea.vmem %s0, 224
        %v1217 = vld [vmem:[%s1216] sm:$0xff]
        %v1218 = vld [vmem:[%s1216 + $0x8] sm:$0xff]
        %v1219 = vld [vmem:[%s1216 + $0x10] sm:$0xff]
        %v1220 = vld [vmem:[%s1216 + $0x18] sm:$0xff]
        %v1222 = vsel %vm195, %v1208, 0
        %v1225 = vsel %vm195, %v1209, 0
        %v1228 = vsel %vm195, %v1210, 0
        %v1231 = vsel %vm195, %v1211, 0
        %v1234 = vsel %vm195, %v1212, 0
        %v1237 = vsel %vm195, %v1213, 0
        %v1240 = vsel %vm195, %v1214, 0
        %v1243 = vsel %vm195, %v1215, 0
        %1245 = vmatprep.subr.mxu0 0.0
        %1246 = vmatpush1.msra.mxu0 %v1217
        %1247 = vmatprep.subr.mxu0 0.0
        %1248 = vmatpush1.msra.mxu0 %v1218
        %1249 = vmatprep.subr.mxu0 0.0
        %1250 = vmatpush1.msra.mxu0 %v1219
        %1251 = vmatprep.subr.mxu0 0.0
        %1252 = vmatpush1.msra.mxu0 %v1220
        %1253 = vmatprep.subr.mxu0 0.0
        %1254 = vmatpush1.msra.mxu0 0.0
        %1255 = vmatprep.subr.mxu0 0.0
        %1256 = vmatpush1.msra.mxu0 0.0
        %1257 = vmatprep.subr.mxu0 0.0
        %1258 = vmatpush1.msra.mxu0 0.0
        %1259 = vmatprep.subr.mxu0 0.0
        %1260 = vmatpush1.msra.mxu0 0.0
        %1261 = vmatprep.subr.mxu0 0.0
        %1262 = vmatpush1.msra.mxu0 0.0
        %1263 = vmatprep.subr.mxu0 0.0
        %1264 = vmatpush1.msra.mxu0 0.0
        %1265 = vmatprep.subr.mxu0 0.0
        %1266 = vmatpush1.msra.mxu0 0.0
        %1267 = vmatprep.subr.mxu0 0.0
        %1268 = vmatpush1.msra.mxu0 0.0
        %1269 = vmatprep.subr.mxu0 0.0
        %1270 = vmatpush1.msra.mxu0 0.0
        %1271 = vmatprep.subr.mxu0 0.0
        %1272 = vmatpush1.msra.mxu0 0.0
        %1273 = vmatprep.subr.mxu0 0.0
        %1274 = vmatpush1.msra.mxu0 0.0
        %1275 = vmatprep.subr.mxu0 0.0
        %1276 = vmatpush1.msra.mxu0 0.0
        %1277 = vmatprep.subr.mxu0 0.0
        %1278 = vmatpush1.msra.mxu0 0.0
        %1279 = vmatprep.subr.mxu0 0.0
        %1280 = vmatpush1.msra.mxu0 0.0
        %1281 = vmatprep.subr.mxu0 0.0
        %1282 = vmatpush1.msra.mxu0 0.0
        %1283 = vmatprep.subr.mxu0 0.0
        %1284 = vmatpush1.msra.mxu0 0.0
        %1285 = vmatprep.subr.mxu0 0.0
        %1286 = vmatpush1.msra.mxu0 0.0
        %1287 = vmatprep.subr.mxu0 0.0
        %1288 = vmatpush1.msra.mxu0 0.0
        %1289 = vmatprep.subr.mxu0 0.0
        %1290 = vmatpush1.msra.mxu0 0.0
        %1291 = vmatprep.subr.mxu0 0.0
        %1292 = vmatpush1.msra.mxu0 0.0
        %1293 = vmatprep.subr.mxu0 0.0
        %1294 = vmatpush1.msra.mxu0 0.0
        %1295 = vmatprep.subr.mxu0 0.0
        %1296 = vmatpush1.msra.mxu0 0.0
        %1297 = vmatprep.subr.mxu0 0.0
        %1298 = vmatpush1.msra.mxu0 0.0
        %1299 = vmatprep.subr.mxu0 0.0
        %1300 = vmatpush1.msra.mxu0 0.0
        %1301 = vmatprep.subr.mxu0 0.0
        %1302 = vmatpush1.msra.mxu0 0.0
        %1303 = vmatprep.subr.mxu0 0.0
        %1304 = vmatpush1.msra.mxu0 0.0
        %1305 = vmatprep.subr.mxu0 0.0
        %1306 = vmatpush1.msra.mxu0 0.0
        %1307 = vmatprep.subr.mxu0 0.0
        %1308 = vmatpush1.msra.mxu0 0.0
        %1309 = vmatprep.mubr.f32.mxu0 0.0
        %1310 = vmatmul.mubr.f32.gmra.mrb[0].mxu0 %v1222
        %v1311 = vpop.f32.mrb[0].mxu0
        %v1312 = vadd.f32 0.0, %v1311
        %v1313 = vpop.f32.mrb[0].mxu0
        %1314 = vmatprep.mubr.f32.mxu0 0.0
        %1315 = vmatmul.mubr.f32.gmra.mrb[0].mxu0 %v1225
        %v1316 = vpop.f32.mrb[0].mxu0
        %v1317 = vadd.f32 0.0, %v1316
        %v1318 = vpop.f32.mrb[0].mxu0
        %1319 = vmatprep.mubr.f32.mxu0 0.0
        %1320 = vmatmul.mubr.f32.gmra.mrb[0].mxu0 %v1228
        %v1321 = vpop.f32.mrb[0].mxu0
        %v1322 = vadd.f32 0.0, %v1321
        %v1323 = vpop.f32.mrb[0].mxu0
        %1324 = vmatprep.mubr.f32.mxu0 0.0
        %1325 = vmatmul.mubr.f32.gmra.mrb[0].mxu0 %v1231
        %v1326 = vpop.f32.mrb[0].mxu0
        %v1327 = vadd.f32 0.0, %v1326
        %v1328 = vpop.f32.mrb[0].mxu0
        %1329 = vmatprep.mubr.f32.mxu0 0.0
        %1330 = vmatmul.mubr.f32.gmra.mrb[0].mxu0 %v1234
        %v1331 = vpop.f32.mrb[0].mxu0
        %v1332 = vadd.f32 0.0, %v1331
        %v1333 = vpop.f32.mrb[0].mxu0
        %1334 = vmatprep.mubr.f32.mxu0 0.0
        %1335 = vmatmul.mubr.f32.gmra.mrb[0].mxu0 %v1237
        %v1336 = vpop.f32.mrb[0].mxu0
        %v1337 = vadd.f32 0.0, %v1336
        %v1338 = vpop.f32.mrb[0].mxu0
        %1339 = vmatprep.mubr.f32.mxu0 0.0
        %1340 = vmatmul.mubr.f32.gmra.mrb[0].mxu0 %v1240
        %v1341 = vpop.f32.mrb[0].mxu0
        %v1342 = vadd.f32 0.0, %v1341
        %v1343 = vpop.f32.mrb[0].mxu0
        %1344 = vmatprep.mubr.f32.mxu0 0.0
        %1345 = vmatmul.mubr.f32.gmra.mrb[0].mxu0 %v1243
        %v1346 = vpop.f32.mrb[0].mxu0
        %v1347 = vadd.f32 0.0, %v1346
        %v1348 = vpop.f32.mrb[0].mxu0
        %1349 = vdwg.mxu0
        %v1350 = vadd.f32 %v1199, %v1312
        %v1351 = vadd.f32 %v1200, %v1317
        %v1352 = vadd.f32 %v1201, %v1322
        %v1353 = vadd.f32 %v1202, %v1327
        %v1354 = vadd.f32 %v1203, %v1332
        %v1355 = vadd.f32 %v1204, %v1337
        %v1356 = vadd.f32 %v1205, %v1342
        %v1357 = vadd.f32 %v1206, %v1347
        %v1358 = vld [vmem:[%s1056 + $0x1] sm:$0xff]
        %v1359 = vld [vmem:[%s1056 + $0x11] sm:$0xff]
        %v1360 = vld [vmem:[%s1056 + $0x21] sm:$0xff]
        %v1361 = vld [vmem:[%s1056 + $0x31] sm:$0xff]
        %v1362 = vld [vmem:[%s1056 + $0x41] sm:$0xff]
        %v1363 = vld [vmem:[%s1056 + $0x51] sm:$0xff]
        %v1364 = vld [vmem:[%s1056 + $0x61] sm:$0xff]
        %v1365 = vld [vmem:[%s1056 + $0x71] sm:$0xff]
        %s1366 = scalar_lea.vmem %s0, 256
        %v1367 = vld [vmem:[%s1366] sm:$0xff]
        %v1368 = vld [vmem:[%s1366 + $0x8] sm:$0xff]
        %v1369 = vld [vmem:[%s1366 + $0x10] sm:$0xff]
        %v1370 = vld [vmem:[%s1366 + $0x18] sm:$0xff]
        %v1372 = vsel %vm195, %v1358, 0
        %v1375 = vsel %vm195, %v1359, 0
        %v1378 = vsel %vm195, %v1360, 0
        %v1381 = vsel %vm195, %v1361, 0
        %v1384 = vsel %vm195, %v1362, 0
        %v1387 = vsel %vm195, %v1363, 0
        %v1390 = vsel %vm195, %v1364, 0
        %v1393 = vsel %vm195, %v1365, 0
        %1395 = vmatprep.subr.mxu0 0.0
        %1396 = vmatpush1.msra.mxu0 %v1367
        %1397 = vmatprep.subr.mxu0 0.0
        %1398 = vmatpush1.msra.mxu0 %v1368
        %1399 = vmatprep.subr.mxu0 0.0
        %1400 = vmatpush1.msra.mxu0 %v1369
        %1401 = vmatprep.subr.mxu0 0.0
        %1402 = vmatpush1.msra.mxu0 %v1370
        %1403 = vmatprep.subr.mxu0 0.0
        %1404 = vmatpush1.msra.mxu0 0.0
        %1405 = vmatprep.subr.mxu0 0.0
        %1406 = vmatpush1.msra.mxu0 0.0
        %1407 = vmatprep.subr.mxu0 0.0
        %1408 = vmatpush1.msra.mxu0 0.0
        %1409 = vmatprep.subr.mxu0 0.0
        %1410 = vmatpush1.msra.mxu0 0.0
        %1411 = vmatprep.subr.mxu0 0.0
        %1412 = vmatpush1.msra.mxu0 0.0
        %1413 = vmatprep.subr.mxu0 0.0
        %1414 = vmatpush1.msra.mxu0 0.0
        %1415 = vmatprep.subr.mxu0 0.0
        %1416 = vmatpush1.msra.mxu0 0.0
        %1417 = vmatprep.subr.mxu0 0.0
        %1418 = vmatpush1.msra.mxu0 0.0
        %1419 = vmatprep.subr.mxu0 0.0
        %1420 = vmatpush1.msra.mxu0 0.0
        %1421 = vmatprep.subr.mxu0 0.0
        %1422 = vmatpush1.msra.mxu0 0.0
        %1423 = vmatprep.subr.mxu0 0.0
        %1424 = vmatpush1.msra.mxu0 0.0
        %1425 = vmatprep.subr.mxu0 0.0
        %1426 = vmatpush1.msra.mxu0 0.0
        %1427 = vmatprep.subr.mxu0 0.0
        %1428 = vmatpush1.msra.mxu0 0.0
        %1429 = vmatprep.subr.mxu0 0.0
        %1430 = vmatpush1.msra.mxu0 0.0
        %1431 = vmatprep.subr.mxu0 0.0
        %1432 = vmatpush1.msra.mxu0 0.0
        %1433 = vmatprep.subr.mxu0 0.0
        %1434 = vmatpush1.msra.mxu0 0.0
        %1435 = vmatprep.subr.mxu0 0.0
        %1436 = vmatpush1.msra.mxu0 0.0
        %1437 = vmatprep.subr.mxu0 0.0
        %1438 = vmatpush1.msra.mxu0 0.0
        %1439 = vmatprep.subr.mxu0 0.0
        %1440 = vmatpush1.msra.mxu0 0.0
        %1441 = vmatprep.subr.mxu0 0.0
        %1442 = vmatpush1.msra.mxu0 0.0
        %1443 = vmatprep.subr.mxu0 0.0
        %1444 = vmatpush1.msra.mxu0 0.0
        %1445 = vmatprep.subr.mxu0 0.0
        %1446 = vmatpush1.msra.mxu0 0.0
        %1447 = vmatprep.subr.mxu0 0.0
        %1448 = vmatpush1.msra.mxu0 0.0
        %1449 = vmatprep.subr.mxu0 0.0
        %1450 = vmatpush1.msra.mxu0 0.0
        %1451 = vmatprep.subr.mxu0 0.0
        %1452 = vmatpush1.msra.mxu0 0.0
        %1453 = vmatprep.subr.mxu0 0.0
        %1454 = vmatpush1.msra.mxu0 0.0
        %1455 = vmatprep.subr.mxu0 0.0
        %1456 = vmatpush1.msra.mxu0 0.0
        %1457 = vmatprep.subr.mxu0 0.0
        %1458 = vmatpush1.msra.mxu0 0.0
        %1459 = vmatprep.mubr.f32.mxu0 0.0
        %1460 = vmatmul.mubr.f32.gmra.mrb[0].mxu0 %v1372
        %v1461 = vpop.f32.mrb[0].mxu0
        %v1462 = vadd.f32 0.0, %v1461
        %v1463 = vpop.f32.mrb[0].mxu0
        %1464 = vmatprep.mubr.f32.mxu0 0.0
        %1465 = vmatmul.mubr.f32.gmra.mrb[0].mxu0 %v1375
        %v1466 = vpop.f32.mrb[0].mxu0
        %v1467 = vadd.f32 0.0, %v1466
        %v1468 = vpop.f32.mrb[0].mxu0
        %1469 = vmatprep.mubr.f32.mxu0 0.0
        %1470 = vmatmul.mubr.f32.gmra.mrb[0].mxu0 %v1378
        %v1471 = vpop.f32.mrb[0].mxu0
        %v1472 = vadd.f32 0.0, %v1471
        %v1473 = vpop.f32.mrb[0].mxu0
        %1474 = vmatprep.mubr.f32.mxu0 0.0
        %1475 = vmatmul.mubr.f32.gmra.mrb[0].mxu0 %v1381
        %v1476 = vpop.f32.mrb[0].mxu0
        %v1477 = vadd.f32 0.0, %v1476
        %v1478 = vpop.f32.mrb[0].mxu0
        %1479 = vmatprep.mubr.f32.mxu0 0.0
        %1480 = vmatmul.mubr.f32.gmra.mrb[0].mxu0 %v1384
        %v1481 = vpop.f32.mrb[0].mxu0
        %v1482 = vadd.f32 0.0, %v1481
        %v1483 = vpop.f32.mrb[0].mxu0
        %1484 = vmatprep.mubr.f32.mxu0 0.0
        %1485 = vmatmul.mubr.f32.gmra.mrb[0].mxu0 %v1387
        %v1486 = vpop.f32.mrb[0].mxu0
        %v1487 = vadd.f32 0.0, %v1486
        %v1488 = vpop.f32.mrb[0].mxu0
        %1489 = vmatprep.mubr.f32.mxu0 0.0
        %1490 = vmatmul.mubr.f32.gmra.mrb[0].mxu0 %v1390
        %v1491 = vpop.f32.mrb[0].mxu0
        %v1492 = vadd.f32 0.0, %v1491
        %v1493 = vpop.f32.mrb[0].mxu0
        %1494 = vmatprep.mubr.f32.mxu0 0.0
        %1495 = vmatmul.mubr.f32.gmra.mrb[0].mxu0 %v1393
        %v1496 = vpop.f32.mrb[0].mxu0
        %v1497 = vadd.f32 0.0, %v1496
        %v1498 = vpop.f32.mrb[0].mxu0
        %1499 = vdwg.mxu0
        %v1500 = vadd.f32 %v1350, %v1462
        %v1501 = vadd.f32 %v1351, %v1467
        %v1502 = vadd.f32 %v1352, %v1472
        %v1503 = vadd.f32 %v1353, %v1477
        %v1504 = vadd.f32 %v1354, %v1482
        %v1505 = vadd.f32 %v1355, %v1487
        %v1506 = vadd.f32 %v1356, %v1492
        %v1507 = vadd.f32 %v1357, %v1497
        %v1508 = vld [vmem:[%s1] sm:$0x1]
        %v1510 = vlaneseq
        %v1511 = vshrl.u32 %v1510, 7
        %v1512 = vsub.s32 0, %v1511
        %v1513 = vrot.slane %v1508, %v1512
        %v1515 = vadd.f32 %v1500, %v1513
        %v1516 = vadd.f32 %v1501, %v1513
        %v1517 = vadd.f32 %v1502, %v1513
        %v1518 = vadd.f32 %v1503, %v1513
        %v1519 = vadd.f32 %v1504, %v1513
        %v1520 = vadd.f32 %v1505, %v1513
        %v1521 = vadd.f32 %v1506, %v1513
        %v1522 = vadd.f32 %v1507, %v1513
        %1523 = vst.msk [vmem:[%s163] sm:$0xff] %vm195, %v1515
        %1524 = vst.msk [vmem:[%s163 + $0x8] sm:$0xff] %vm195, %v1516
        %1525 = vst.msk [vmem:[%s163 + $0x10] sm:$0xff] %vm195, %v1517
        %1526 = vst.msk [vmem:[%s163 + $0x18] sm:$0xff] %vm195, %v1518
        %1527 = vst.msk [vmem:[%s163 + $0x20] sm:$0xff] %vm195, %v1519
        %1528 = vst.msk [vmem:[%s163 + $0x28] sm:$0xff] %vm195, %v1520
        %1529 = vst.msk [vmem:[%s163 + $0x30] sm:$0xff] %vm195, %v1521
        %1530 = vst.msk [vmem:[%s163 + $0x38] sm:$0xff] %vm195, %v1522
        %s1531 = sand.u32 %s93, 1
        %s1532 = scalar_lea.sflag [#allocation3], %s1531
        %s1533 = sand.u32 %s93, 1
        %s1534 = smul.addr %s1533, 64
        %s1535 = scalar_lea.vmem [#allocation2], %s1534
        // Predicated region
        $region33: #{down_sample.1} parent=31 // pred_check
          %p1536 = pneg %p103
        $region34: #{down_sample.1} parent=31 // pred_check_branch
          %1538 = sbr.rel (%p1536) target = $region36
        $region35: #{down_sample.1} parent=31 // pred_region
          %s1540 = ssub.s32 1024, 1024
          %1541 = vsyncadd %s1532, %s1540
          %s1542 = smul.addr %s17, 8
          %s1543 = smul.addr %s1542, 128
          %s1544 = scalar_lea.hbm %s3, %s1543
          %s1545 = sshll.u32 %s1535, 4
          %s1546 = int_to_ptr.vmem [resolvable:$true] %s1545
          %1551 = dma.vmem_to_hbm [thread:$0]  %s1546, 1024, %s1544, %s1532, 128, 128, 8
        $region36: #{down_sample.1} parent=31 // pred_fallthru
          _
      $region32: #{down_sample.1} parent=5 // pred_fallthru
        _
      %p1552 = scmp.le.s32.totalorder 2, %s12
      // Predicated region
      $region37: #{down_sample.1} parent=5 // pred_check
        %p1553 = pneg %p1552
      $region38: #{down_sample.1} parent=5 // pred_check_branch
        %1555 = sbr.rel (%p1553) target = $region40
      $region39: #{down_sample.1} parent=5 // pred_region
        %s1556 = ssub.s32 %s12, 2
        // Predicated region
        $region41: #{down_sample.1} parent=39 // pred_check
          %p1557 = pneg %p109
        $region42: #{down_sample.1} parent=39 // pred_check_branch
          %1559 = sbr.rel (%p1557) target = $region44
        $region43: #{down_sample.1} parent=39 // pred_region
          %s1560 = sand.u32 %s94, 1
          %s1561 = scalar_lea.sflag [#allocation3], %s1560
          %s1562 = sand.u32 %s94, 1
          %s1563 = smul.addr %s1562, 64
          %s1564 = scalar_lea.vmem [#allocation2], %s1563
          %1565 = dma.done %s1561, 1024
        $region44: #{down_sample.1} parent=39 // pred_fallthru
          _
      $region40: #{down_sample.1} parent=5 // pred_fallthru
        _
    $region6: #{down_sample.1} parent=1 // loop_footer
      %s16 = sadd.s32 1, %s12
    $region7: #{down_sample.1} parent=1 // loop_footer_branch
      %11 = sbr.rel target = $region3
    $region8: #{down_sample.1} parent=1 // loop_exit
      _
    %1566 = vsyncpa [#allocation3], 1
    %s1567 = scalar_lea.sflag [#allocation3], 1
    %1568 = vsyncpa %s1567, 1

</llo_original>
